<compile_context>
chip_gen: v7x
topology: tpu7x:2x2x1
jax: 0.10.0
libtpu: 0.0.40
codegen_flags: <defaults>
</compile_context>

<pallas_src>
import functools

import jax
import jax.numpy as jnp
from jax.experimental import pallas as pl
from jax.experimental.pallas import tpu as pltpu

LANE = 128


def _round_up(x, m):
    return ((x + m - 1) // m) * m


# ----------------------------- Pallas kernels ------------------------------

def matmul_bias_relu_kernel(x_ref, w_ref, b_ref, o_ref):
    # bf16 x bf16 -> f32 accumulate on the MXU, fused bias + ReLU epilogue.
    z = jnp.dot(x_ref[...], w_ref[...], preferred_element_type=jnp.float32)
    o_ref[...] = jnp.maximum(z + b_ref[...], 0.0)


def matmul_bias_logsoftmax_kernel(x_ref, w_ref, b_ref, o_ref, *, n_valid):
    # Padded (lane-dense) N: mask out the padding columns before the softmax.
    z = jnp.dot(x_ref[...], w_ref[...], preferred_element_type=jnp.float32)
    z = z + b_ref[...]
    col = jax.lax.broadcasted_iota(jnp.int32, z.shape, 1)
    valid = col < n_valid
    zm = jnp.where(valid, z, jnp.float32(-1e30))
    m = jnp.max(zm, axis=-1, keepdims=True)
    e = jnp.where(valid, jnp.exp(zm - m), 0.0)
    s = jnp.sum(e, axis=-1, keepdims=True)
    o_ref[...] = zm - m - jnp.log(s)


# ----------------------------- Pallas wrapper -------------------------------

def pallas_matmul_bias(x, w_pad, b_pad, *, activation="relu", n_valid=None, tm_max=256):
    """y = act(x @ w_pad + b_pad).

    x:     (M, K)     float32 (cast to bf16 for the MXU)
    w_pad: (K, Npad)  bf16, Npad % 128 == 0 (pre-padded, pre-transposed)
    b_pad: (1, Npad)  float32
    Returns (M, Npad) float32.
    """
    M, K = x.shape
    K2, Npad = w_pad.shape
    assert K == K2 and Npad % LANE == 0

    tm = min(tm_max, _round_up(max(M, 16), 16))
    Mp = _round_up(M, tm)
    if Mp != M:
        x = jnp.pad(x, ((0, Mp - M), (0, 0)))
    x = x.astype(jnp.bfloat16)

    if activation == "relu":
        kernel = matmul_bias_relu_kernel
    else:
        kernel = functools.partial(matmul_bias_logsoftmax_kernel, n_valid=n_valid)

    out = pl.pallas_call(
        kernel,
        out_shape=jax.ShapeDtypeStruct((Mp, Npad), jnp.float32),
        grid=(Mp // tm,),
        in_specs=[
            pl.BlockSpec((tm, K), lambda i: (i, 0)),      # activations: M-tiled
            pl.BlockSpec((K, Npad), lambda i: (0, 0)),    # weights: resident
            pl.BlockSpec((1, Npad), lambda i: (0, 0)),    # bias: resident
        ],
        out_specs=pl.BlockSpec((tm, Npad), lambda i: (i, 0)),
        compiler_params=pltpu.CompilerParams(
            dimension_semantics=("parallel",)),
    )(x, w_pad, b_pad)
    return out[:M]


# --------------------------- XLA glue (under jit) ---------------------------

def _im2col_nhwc(x, k):
    """Valid, stride-1 patches. x:(B,H,W,C) -> (B*OH*OW, k*k*C), features ordered (kh, kw, cin)."""
    B, H, W, C = x.shape
    OH, OW = H - k + 1, W - k + 1
    cols = []
    for i in range(k):
        for j in range(k):
            cols.append(x[:, i:i + OH, j:j + OW, :])          # (B, OH, OW, C)
    p = jnp.concatenate(cols, axis=-1)                        # (B, OH, OW, k*k*C)
    return p.reshape(B * OH * OW, k * k * C), OH, OW


def _maxpool2x2_nhwc(x):
    B, H, W, C = x.shape
    return jnp.max(x.reshape(B, H // 2, 2, W // 2, 2, C), axis=(2, 4))


# ------------------------------- the model ---------------------------------

def init_params(key):
    ks = jax.random.split(key, 8)

    def uniform(k, shape, fan_in):
        bound = 1.0 / jnp.sqrt(fan_in)
        return jax.random.uniform(k, shape, jnp.float32, -bound, bound)

    return {
        "conv1_w": uniform(ks[0], (20, 1, 5, 5), 1 * 5 * 5),
        "conv1_b": uniform(ks[1], (20,), 1 * 5 * 5),
        "conv2_w": uniform(ks[2], (50, 20, 5, 5), 20 * 5 * 5),
        "conv2_b": uniform(ks[3], (50,), 20 * 5 * 5),
        "fc1_w": uniform(ks[4], (500, 800), 800),   # PyTorch Linear: (out, in)
        "fc1_b": uniform(ks[5], (500,), 800),
        "fc2_w": uniform(ks[6], (10, 500), 500),
        "fc2_b": uniform(ks[7], (10,), 500),
    }


def prepare_params(params):
    """One-time weight prep: transpose to (K, N), pad K to x16 / N to x128, cast weights to bf16."""
    def prep(wmat, bias, k_pad, n_pad):
        K, N = wmat.shape
        w = jnp.pad(wmat, ((0, k_pad - K), (0, n_pad - N))).astype(jnp.bfloat16)
        b = jnp.pad(bias, (0, n_pad - N)).reshape(1, n_pad).astype(jnp.float32)
        return w, b

    # conv weights flattened in (kh, kw, cin) order to match the NHWC im2col.
    c1 = params["conv1_w"].transpose(2, 3, 1, 0).reshape(5 * 5 * 1, 20)
    c2 = params["conv2_w"].transpose(2, 3, 1, 0).reshape(5 * 5 * 20, 50)
    f1 = params["fc1_w"].T                                        # (800, 500)
    f2 = params["fc2_w"].T                                        # (500, 10)

    out = {}
    out["conv1_w"], out["conv1_b"] = prep(c1, params["conv1_b"], 32, 128)
    out["conv2_w"], out["conv2_b"] = prep(c2, params["conv2_b"], 512, 128)
    out["fc1_w"], out["fc1_b"] = prep(f1, params["fc1_b"], 800, 512)
    out["fc2_w"], out["fc2_b"] = prep(f2, params["fc2_b"], 512, 128)
    return out


@jax.jit
def forward(prep, x):
    # x: (B, 1, 28, 28) float32, NCHW (PyTorch convention)
    B = x.shape[0]
    x = x.transpose(0, 2, 3, 1)                                            # NHWC (B,28,28,1)

    # conv1 + ReLU (Cout padded to 128, lane-dense), then 2x2 pool
    p1, oh1, ow1 = _im2col_nhwc(x, 5)                                      # (B*576, 25)
    p1 = jnp.pad(p1, ((0, 0), (0, 32 - 25)))                               # K pad for bf16
    y1 = pallas_matmul_bias(p1, prep["conv1_w"], prep["conv1_b"])          # (B*576, 128)
    y1 = y1.reshape(B, oh1, ow1, -1)                                       # (B,24,24,128)
    y1 = _maxpool2x2_nhwc(y1)[..., :20]                                    # (B,12,12,20)

    # conv2 + ReLU, then 2x2 pool
    p2, oh2, ow2 = _im2col_nhwc(y1, 5)                                     # (B*64, 500)
    p2 = jnp.pad(p2, ((0, 0), (0, 512 - 500)))
    y2 = pallas_matmul_bias(p2, prep["conv2_w"], prep["conv2_b"])          # (B*64, 128)
    y2 = y2.reshape(B, oh2, ow2, -1)                                       # (B,8,8,128)
    y2 = _maxpool2x2_nhwc(y2)[..., :50]                                    # (B,4,4,50)

    # flatten in PyTorch NCHW order: (B, 50, 4, 4) -> (B, 800)
    flat = y2.transpose(0, 3, 1, 2).reshape(B, 4 * 4 * 50)

    h = pallas_matmul_bias(flat, prep["fc1_w"], prep["fc1_b"])             # (B, 512)
    out = pallas_matmul_bias(h, prep["fc2_w"], prep["fc2_b"],
                             activation="log_softmax", n_valid=10)         # (B, 128)
    return out[:, :10]


if __name__ == "__main__":
    key = jax.random.PRNGKey(0)
    pkey, xkey = jax.random.split(key)
    params = init_params(pkey)
    prep = prepare_params(params)

    # input consistent with the module: 28x28 single-channel (so 4*4*50 flatten works)
    x = jax.random.normal(xkey, (2, 1, 28, 28), jnp.float32)

    out = forward(prep, x)
    out = jax.block_until_ready(out)

    assert out.shape == (2, 10) and out.dtype == jnp.float32
    # log_softmax rows must exponentiate-sum to 1
    assert bool(jnp.allclose(jnp.sum(jnp.exp(out), axis=1), 1.0, atol=1e-4))
    print("KERNEL_OK")
</pallas_src>

<mosaic_0001>
module attributes {stable_mosaic.version = 11 : i64} {
  func.func @matmul_bias_relu_kernel(%arg0: i32, %arg1: memref<256x32xbf16, #tpu.memory_space<vmem>>, %arg2: memref<32x128xbf16, #tpu.memory_space<vmem>>, %arg3: memref<1x128xf32, #tpu.memory_space<vmem>>, %arg4: memref<256x128xf32, #tpu.memory_space<vmem>>) attributes {dimension_semantics = [#tpu.dimension_semantics<parallel>], iteration_bounds = array<i64: 5>, scalar_prefetch = 0 : i64, scratch_operands = 0 : i64, tpu.core_type = #tpu.core_type<tc>, window_params = [{transform_indices = @transform_0, window_bounds = array<i64: 256, 32>}, {pipeline_mode = #tpu.pipeline_mode<synchronous>, transform_indices = @transform_1, window_bounds = array<i64: 32, 128>}, {pipeline_mode = #tpu.pipeline_mode<synchronous>, transform_indices = @transform_2, window_bounds = array<i64: 1, 128>}, {transform_indices = @transform_3, window_bounds = array<i64: 256, 128>}]} {
    %c0 = arith.constant 0 : index
    %c0_0 = arith.constant 0 : index
    %0 = vector.load %arg1[%c0, %c0_0] : memref<256x32xbf16, #tpu.memory_space<vmem>>, vector<256x32xbf16>
    %c0_1 = arith.constant 0 : index
    %c0_2 = arith.constant 0 : index
    %1 = vector.load %arg2[%c0_1, %c0_2] : memref<32x128xbf16, #tpu.memory_space<vmem>>, vector<32x128xbf16>
    %cst = arith.constant dense<0.000000e+00> : vector<256x128xf32>
    %2 = tpu.matmul %0, %1, %cst {dimension_numbers = #tpu.dot_dimension_numbers<[1], [0], [0], [1], [0, 0, 1, 1], [], []>} : vector<256x32xbf16>, vector<32x128xbf16>, vector<256x128xf32> -> vector<256x128xf32>
    %c0_3 = arith.constant 0 : index
    %c0_4 = arith.constant 0 : index
    %3 = vector.load %arg3[%c0_3, %c0_4] : memref<1x128xf32, #tpu.memory_space<vmem>>, vector<1x128xf32>
    %4 = vector.broadcast %3 : vector<1x128xf32> to vector<256x128xf32>
    %5 = arith.addf %2, %4 : vector<256x128xf32>
    %cst_5 = arith.constant 0.000000e+00 : f32
    %6 = vector.broadcast %cst_5 : f32 to vector<256x128xf32>
    %7 = arith.maximumf %5, %6 : vector<256x128xf32>
    %c0_6 = arith.constant 0 : index
    %c0_7 = arith.constant 0 : index
    %8 = vector.load %arg4[%c0_6, %c0_7] : memref<256x128xf32, #tpu.memory_space<vmem>>, vector<256x128xf32>
    tpu.vector_store %arg4[%c0_6, %c0_7], %7 {strides = array<i32>} : memref<256x128xf32, #tpu.memory_space<vmem>>, vector<256x128xf32>,
    return
  }
  func.func @transform_0(%arg0: i32) -> (i32, i32) {
    %c0_i32 = arith.constant 0 : i32
    %c0_i32_0 = arith.constant 0 : i32
    return %arg0, %c0_i32 : i32, i32
  }
  func.func @transform_1(%arg0: i32) -> (i32, i32) {
    %c0_i32 = arith.constant 0 : i32
    %c0_i32_0 = arith.constant 0 : i32
    %c0_i32_1 = arith.constant 0 : i32
    return %c0_i32, %c0_i32_0 : i32, i32
  }
  func.func @transform_2(%arg0: i32) -> (i32, i32) {
    %c0_i32 = arith.constant 0 : i32
    %c0_i32_0 = arith.constant 0 : i32
    %c0_i32_1 = arith.constant 0 : i32
    return %c0_i32, %c0_i32_0 : i32, i32
  }
  func.func @transform_3(%arg0: i32) -> (i32, i32) {
    %c0_i32 = arith.constant 0 : i32
    %c0_i32_0 = arith.constant 0 : i32
    return %arg0, %c0_i32 : i32, i32
  }
}

module attributes {stable_mosaic.version = 11 : i64} {
  func.func @matmul_bias_relu_kernel(%arg0: i32, %arg1: memref<128x512xbf16, #tpu.memory_space<vmem>>, %arg2: memref<512x128xbf16, #tpu.memory_space<vmem>>, %arg3: memref<1x128xf32, #tpu.memory_space<vmem>>, %arg4: memref<128x128xf32, #tpu.memory_space<vmem>>) attributes {dimension_semantics = [#tpu.dimension_semantics<parallel>], iteration_bounds = array<i64: 1>, scalar_prefetch = 0 : i64, scratch_operands = 0 : i64, tpu.core_type = #tpu.core_type<tc>, window_params = [{transform_indices = @transform_0, window_bounds = array<i64: 128, 512>}, {pipeline_mode = #tpu.pipeline_mode<synchronous>, transform_indices = @transform_1, window_bounds = array<i64: 512, 128>}, {pipeline_mode = #tpu.pipeline_mode<synchronous>, transform_indices = @transform_2, window_bounds = array<i64: 1, 128>}, {transform_indices = @transform_3, window_bounds = array<i64: 128, 128>}]} {
    %c0 = arith.constant 0 : index
    %c0_0 = arith.constant 0 : index
    %0 = vector.load %arg1[%c0, %c0_0] : memref<128x512xbf16, #tpu.memory_space<vmem>>, vector<128x512xbf16>
    %c0_1 = arith.constant 0 : index
    %c0_2 = arith.constant 0 : index
    %1 = vector.load %arg2[%c0_1, %c0_2] : memref<512x128xbf16, #tpu.memory_space<vmem>>, vector<512x128xbf16>
    %cst = arith.constant dense<0.000000e+00> : vector<128x128xf32>
    %2 = tpu.matmul %0, %1, %cst {dimension_numbers = #tpu.dot_dimension_numbers<[1], [0], [0], [1], [0, 0, 1, 1], [], []>} : vector<128x512xbf16>, vector<512x128xbf16>, vector<128x128xf32> -> vector<128x128xf32>
    %c0_3 = arith.constant 0 : index
    %c0_4 = arith.constant 0 : index
    %3 = vector.load %arg3[%c0_3, %c0_4] : memref<1x128xf32, #tpu.memory_space<vmem>>, vector<1x128xf32>
    %4 = vector.broadcast %3 : vector<1x128xf32> to vector<128x128xf32>
    %5 = arith.addf %2, %4 : vector<128x128xf32>
    %cst_5 = arith.constant 0.000000e+00 : f32
    %6 = vector.broadcast %cst_5 : f32 to vector<128x128xf32>
    %7 = arith.maximumf %5, %6 : vector<128x128xf32>
    %c0_6 = arith.constant 0 : index
    %c0_7 = arith.constant 0 : index
    %8 = vector.load %arg4[%c0_6, %c0_7] : memref<128x128xf32, #tpu.memory_space<vmem>>, vector<128x128xf32>
    tpu.vector_store %arg4[%c0_6, %c0_7], %7 {strides = array<i32>} : memref<128x128xf32, #tpu.memory_space<vmem>>, vector<128x128xf32>,
    return
  }
  func.func @transform_0(%arg0: i32) -> (i32, i32) {
    %c0_i32 = arith.constant 0 : i32
    %c0_i32_0 = arith.constant 0 : i32
    return %arg0, %c0_i32 : i32, i32
  }
  func.func @transform_1(%arg0: i32) -> (i32, i32) {
    %c0_i32 = arith.constant 0 : i32
    %c0_i32_0 = arith.constant 0 : i32
    %c0_i32_1 = arith.constant 0 : i32
    return %c0_i32, %c0_i32_0 : i32, i32
  }
  func.func @transform_2(%arg0: i32) -> (i32, i32) {
    %c0_i32 = arith.constant 0 : i32
    %c0_i32_0 = arith.constant 0 : i32
    %c0_i32_1 = arith.constant 0 : i32
    return %c0_i32, %c0_i32_0 : i32, i32
  }
  func.func @transform_3(%arg0: i32) -> (i32, i32) {
    %c0_i32 = arith.constant 0 : i32
    %c0_i32_0 = arith.constant 0 : i32
    return %arg0, %c0_i32 : i32, i32
  }
}

module attributes {stable_mosaic.version = 11 : i64} {
  func.func @matmul_bias_relu_kernel(%arg0: i32, %arg1: memref<16x800xbf16, #tpu.memory_space<vmem>>, %arg2: memref<800x512xbf16, #tpu.memory_space<vmem>>, %arg3: memref<1x512xf32, #tpu.memory_space<vmem>>, %arg4: memref<16x512xf32, #tpu.memory_space<vmem>>) attributes {dimension_semantics = [#tpu.dimension_semantics<parallel>], iteration_bounds = array<i64: 1>, scalar_prefetch = 0 : i64, scratch_operands = 0 : i64, tpu.core_type = #tpu.core_type<tc>, window_params = [{transform_indices = @transform_0, window_bounds = array<i64: 16, 800>}, {pipeline_mode = #tpu.pipeline_mode<synchronous>, transform_indices = @transform_1, window_bounds = array<i64: 800, 512>}, {pipeline_mode = #tpu.pipeline_mode<synchronous>, transform_indices = @transform_2, window_bounds = array<i64: 1, 512>}, {transform_indices = @transform_3, window_bounds = array<i64: 16, 512>}]} {
    %c0 = arith.constant 0 : index
    %c0_0 = arith.constant 0 : index
    %0 = vector.load %arg1[%c0, %c0_0] : memref<16x800xbf16, #tpu.memory_space<vmem>>, vector<16x800xbf16>
    %c0_1 = arith.constant 0 : index
    %c0_2 = arith.constant 0 : index
    %1 = vector.load %arg2[%c0_1, %c0_2] : memref<800x512xbf16, #tpu.memory_space<vmem>>, vector<800x512xbf16>
    %cst = arith.constant dense<0.000000e+00> : vector<16x512xf32>
    %2 = tpu.matmul %0, %1, %cst {dimension_numbers = #tpu.dot_dimension_numbers<[1], [0], [0], [1], [0, 0, 1, 1], [], []>} : vector<16x800xbf16>, vector<800x512xbf16>, vector<16x512xf32> -> vector<16x512xf32>
    %c0_3 = arith.constant 0 : index
    %c0_4 = arith.constant 0 : index
    %3 = vector.load %arg3[%c0_3, %c0_4] : memref<1x512xf32, #tpu.memory_space<vmem>>, vector<1x512xf32>
    %4 = vector.broadcast %3 : vector<1x512xf32> to vector<16x512xf32>
    %5 = arith.addf %2, %4 : vector<16x512xf32>
    %cst_5 = arith.constant 0.000000e+00 : f32
    %6 = vector.broadcast %cst_5 : f32 to vector<16x512xf32>
    %7 = arith.maximumf %5, %6 : vector<16x512xf32>
    %c0_6 = arith.constant 0 : index
    %c0_7 = arith.constant 0 : index
    %8 = vector.load %arg4[%c0_6, %c0_7] : memref<16x512xf32, #tpu.memory_space<vmem>>, vector<16x512xf32>
    tpu.vector_store %arg4[%c0_6, %c0_7], %7 {strides = array<i32>} : memref<16x512xf32, #tpu.memory_space<vmem>>, vector<16x512xf32>,
    return
  }
  func.func @transform_0(%arg0: i32) -> (i32, i32) {
    %c0_i32 = arith.constant 0 : i32
    %c0_i32_0 = arith.constant 0 : i32
    return %arg0, %c0_i32 : i32, i32
  }
  func.func @transform_1(%arg0: i32) -> (i32, i32) {
    %c0_i32 = arith.constant 0 : i32
    %c0_i32_0 = arith.constant 0 : i32
    %c0_i32_1 = arith.constant 0 : i32
    return %c0_i32, %c0_i32_0 : i32, i32
  }
  func.func @transform_2(%arg0: i32) -> (i32, i32) {
    %c0_i32 = arith.constant 0 : i32
    %c0_i32_0 = arith.constant 0 : i32
    %c0_i32_1 = arith.constant 0 : i32
    return %c0_i32, %c0_i32_0 : i32, i32
  }
  func.func @transform_3(%arg0: i32) -> (i32, i32) {
    %c0_i32 = arith.constant 0 : i32
    %c0_i32_0 = arith.constant 0 : i32
    return %arg0, %c0_i32 : i32, i32
  }
}

module attributes {stable_mosaic.version = 11 : i64} {
  func.func @matmul_bias_logsoftmax_kernel(%arg0: i32, %arg1: memref<16x512xbf16, #tpu.memory_space<vmem>>, %arg2: memref<512x128xbf16, #tpu.memory_space<vmem>>, %arg3: memref<1x128xf32, #tpu.memory_space<vmem>>, %arg4: memref<16x128xf32, #tpu.memory_space<vmem>>) attributes {dimension_semantics = [#tpu.dimension_semantics<parallel>], iteration_bounds = array<i64: 1>, scalar_prefetch = 0 : i64, scratch_operands = 0 : i64, tpu.core_type = #tpu.core_type<tc>, window_params = [{transform_indices = @transform_0, window_bounds = array<i64: 16, 512>}, {pipeline_mode = #tpu.pipeline_mode<synchronous>, transform_indices = @transform_1, window_bounds = array<i64: 512, 128>}, {pipeline_mode = #tpu.pipeline_mode<synchronous>, transform_indices = @transform_2, window_bounds = array<i64: 1, 128>}, {transform_indices = @transform_3, window_bounds = array<i64: 16, 128>}]} {
    %c0 = arith.constant 0 : index
    %c0_0 = arith.constant 0 : index
    %0 = vector.load %arg1[%c0, %c0_0] : memref<16x512xbf16, #tpu.memory_space<vmem>>, vector<16x512xbf16>
    %c0_1 = arith.constant 0 : index
    %c0_2 = arith.constant 0 : index
    %1 = vector.load %arg2[%c0_1, %c0_2] : memref<512x128xbf16, #tpu.memory_space<vmem>>, vector<512x128xbf16>
    %cst = arith.constant dense<0.000000e+00> : vector<16x128xf32>
    %2 = tpu.matmul %0, %1, %cst {dimension_numbers = #tpu.dot_dimension_numbers<[1], [0], [0], [1], [0, 0, 1, 1], [], []>} : vector<16x512xbf16>, vector<512x128xbf16>, vector<16x128xf32> -> vector<16x128xf32>
    %c0_3 = arith.constant 0 : index
    %c0_4 = arith.constant 0 : index
    %3 = vector.load %arg3[%c0_3, %c0_4] : memref<1x128xf32, #tpu.memory_space<vmem>>, vector<1x128xf32>
    %4 = vector.broadcast %3 : vector<1x128xf32> to vector<16x128xf32>
    %5 = arith.addf %2, %4 : vector<16x128xf32>
    %6 = tpu.iota {dimensions = array<i32: 1>} : vector<16x128xi32>
    %c10_i32 = arith.constant 10 : i32
    %7 = vector.broadcast %c10_i32 : i32 to vector<16x128xi32>
    %8 = arith.cmpi slt, %6, %7 : vector<16x128xi32>
    %cst_5 = arith.constant -1.000000e+30 : f32
    %9 = vector.broadcast %cst_5 : f32 to vector<16x128xf32>
    %10 = arith.select %8, %5, %9 : vector<16x128xi1>, vector<16x128xf32>
    %cst_6 = arith.constant dense<0xFF800000> : vector<16xf32>
    %11 = vector.multi_reduction <maximumf>, %10, %cst_6 [1] : vector<16x128xf32> to vector<16xf32>
    %12 = vector.shape_cast %11 : vector<16xf32> to vector<16x1xf32>
    %13 = vector.broadcast %12 : vector<16x1xf32> to vector<16x128xf32>
    %14 = arith.subf %10, %13 : vector<16x128xf32>
    %15 = math.exp %14 : vector<16x128xf32>
    %cst_7 = arith.constant 0.000000e+00 : f32
    %16 = vector.broadcast %cst_7 : f32 to vector<16x128xf32>
    %17 = arith.select %8, %15, %16 : vector<16x128xi1>, vector<16x128xf32>
    %cst_8 = arith.constant dense<0.000000e+00> : vector<16xf32>
    %18 = vector.multi_reduction <add>, %17, %cst_8 [1] : vector<16x128xf32> to vector<16xf32>
    %19 = vector.shape_cast %18 : vector<16xf32> to vector<16x1xf32>
    %20 = vector.broadcast %12 : vector<16x1xf32> to vector<16x128xf32>
    %21 = arith.subf %10, %20 : vector<16x128xf32>
    %22 = math.log %19 : vector<16x1xf32>
    %23 = vector.broadcast %22 : vector<16x1xf32> to vector<16x128xf32>
    %24 = arith.subf %21, %23 : vector<16x128xf32>
    %c0_9 = arith.constant 0 : index
    %c0_10 = arith.constant 0 : index
    %25 = vector.load %arg4[%c0_9, %c0_10] : memref<16x128xf32, #tpu.memory_space<vmem>>, vector<16x128xf32>
    tpu.vector_store %arg4[%c0_9, %c0_10], %24 {strides = array<i32>} : memref<16x128xf32, #tpu.memory_space<vmem>>, vector<16x128xf32>,
    return
  }
  func.func @transform_0(%arg0: i32) -> (i32, i32) {
    %c0_i32 = arith.constant 0 : i32
    %c0_i32_0 = arith.constant 0 : i32
    return %arg0, %c0_i32 : i32, i32
  }
  func.func @transform_1(%arg0: i32) -> (i32, i32) {
    %c0_i32 = arith.constant 0 : i32
    %c0_i32_0 = arith.constant 0 : i32
    %c0_i32_1 = arith.constant 0 : i32
    return %c0_i32, %c0_i32_0 : i32, i32
  }
  func.func @transform_2(%arg0: i32) -> (i32, i32) {
    %c0_i32 = arith.constant 0 : i32
    %c0_i32_0 = arith.constant 0 : i32
    %c0_i32_1 = arith.constant 0 : i32
    return %c0_i32, %c0_i32_0 : i32, i32
  }
  func.func @transform_3(%arg0: i32) -> (i32, i32) {
    %c0_i32 = arith.constant 0 : i32
    %c0_i32_0 = arith.constant 0 : i32
    return %arg0, %c0_i32 : i32, i32
  }
}

</mosaic_0001>

<llo_original>
// kernel: forward.4
$region0: #{forward.4}
  #allocation0 [shape = 'u32[]', space=smem, size = 0x4, offset = 0x4, fixed_abs, tag = 'smem constant byte address 0x4 - core index']
  #allocation1 [shape = 'u32[144,128]{1,0:T(1,128)}', space=vmem, size = 0x12000, scoped, tag = 'internal scratch']
  %s0 = inlined_call_operand.vmem [shape: bf16[1280,32], index: 0, kind: input, shape index: {}]
  %s1 = inlined_call_operand.vmem [shape: bf16[32,128], index: 1, kind: input, shape index: {}]
  %s2 = inlined_call_operand.vmem [shape: f32[1,128], index: 2, kind: input, shape index: {}]
  %s3 = inlined_call_operand.vmem [shape: f32[1280,128], index: 3, kind: output, shape index: {}]
  %s4 = sld [smem:[#allocation0]]
  $region45: #{forward.4} parent=0
    _
  %s6 = ssub.s32 1, %s4
  %s7 = scalar_select 0, %s6, %s4
  loop: start=0, step=1, limit=7
  $region2: #{forward.4} parent=0 // loop_pre_header
    _
  $region3: #{forward.4} parent=0 // loop_header
    %s9 = sphi 0, %s13
    %p10 = scmp.ge.s32.totalorder %s9, 7
    %s19 = sphi 0, %s21
    %s22 = sphi 0, %s19
    %s23 = sphi 0, %s22
    %s39 = sphi 0, %s23
    %s43 = sphi 0, %s43
    %s45 = sphi 0, %s43
    %s46 = sphi 0, %s45
    %s60 = sphi 0, %s46
    %s64 = sphi 0, %s64
    %s66 = sphi 0, %s64
    %s67 = sphi 0, %s66
    %s81 = sphi 0, %s67
    %s87 = sphi 0, %s89
    %s90 = sphi 0, %s87
    %s91 = sphi 0, %s90
    %s107 = sphi 0, %s91
  $region4: #{forward.4} parent=0 // loop_header_branch
    %12 = sbr.rel (%p10) target = $region8
  $region5: #{forward.4} parent=0 // loop_body
    %s14 = ssub.s32 %s9, 1
    %s15 = ssub.s32 %s9, 2
    %s16 = sadd.s32 %s9, 1
    %s17 = ssub.s32 %s9, %s16
    %p18 = scmp.eq.s32.totalorder %s17, 0
    %s20 = sadd.s32 %s19, 1
    %s21 = scalar_select %p18, %s19, %s20
    %p24 = pneg %p18
    %p25 = scmp.eq.s32.totalorder %s9, 4
    %p26 = por %p24, %p25
    %p27 = scmp.ne.s32.totalorder %s19, %s22
    %p28 = scmp.eq.s32.totalorder %s9, 0
    %p29 = por %p27, %p28
    %p30 = scmp.ne.s32.totalorder %s19, %s22
    %p31 = scmp.eq.s32.totalorder %s14, 4
    %p32 = por %p30, %p31
    %p33 = scmp.ne.s32.totalorder %s22, %s23
    %p34 = scmp.eq.s32.totalorder %s14, 0
    %p35 = por %p33, %p34
    %p36 = scmp.ne.s32.totalorder %s22, %s23
    %p37 = scmp.eq.s32.totalorder %s15, 4
    %p38 = por %p36, %p37
    %p40 = scmp.ne.s32.totalorder %s23, %s39
    %p41 = scmp.eq.s32.totalorder %s15, 0
    %p42 = por %p40, %p41
    %s44 = sadd.s32 %s43, 1
    %p47 = scmp.eq.s32.totalorder %s9, 4
    %p48 = scmp.ne.s32.totalorder %s43, %s45
    %p49 = scmp.eq.s32.totalorder %s9, 0
    %p50 = por %p48, %p49
    %p51 = scmp.ne.s32.totalorder %s43, %s45
    %p52 = scmp.eq.s32.totalorder %s14, 4
    %p53 = por %p51, %p52
    %p54 = scmp.ne.s32.totalorder %s45, %s46
    %p55 = scmp.eq.s32.totalorder %s14, 0
    %p56 = por %p54, %p55
    %p57 = scmp.ne.s32.totalorder %s45, %s46
    %p58 = scmp.eq.s32.totalorder %s15, 4
    %p59 = por %p57, %p58
    %p61 = scmp.ne.s32.totalorder %s46, %s60
    %p62 = scmp.eq.s32.totalorder %s15, 0
    %p63 = por %p61, %p62
    %s65 = sadd.s32 %s64, 1
    %p68 = scmp.eq.s32.totalorder %s9, 4
    %p69 = scmp.ne.s32.totalorder %s64, %s66
    %p70 = scmp.eq.s32.totalorder %s9, 0
    %p71 = por %p69, %p70
    %p72 = scmp.ne.s32.totalorder %s64, %s66
    %p73 = scmp.eq.s32.totalorder %s14, 4
    %p74 = por %p72, %p73
    %p75 = scmp.ne.s32.totalorder %s66, %s67
    %p76 = scmp.eq.s32.totalorder %s14, 0
    %p77 = por %p75, %p76
    %p78 = scmp.ne.s32.totalorder %s66, %s67
    %p79 = scmp.eq.s32.totalorder %s15, 4
    %p80 = por %p78, %p79
    %p82 = scmp.ne.s32.totalorder %s67, %s81
    %p83 = scmp.eq.s32.totalorder %s15, 0
    %p84 = por %p82, %p83
    %s85 = ssub.s32 %s9, %s16
    %p86 = scmp.eq.s32.totalorder %s85, 0
    %s88 = sadd.s32 %s87, 1
    %s89 = scalar_select %p86, %s87, %s88
    %p92 = pneg %p86
    %p93 = scmp.eq.s32.totalorder %s9, 4
    %p94 = por %p92, %p93
    %p95 = scmp.ne.s32.totalorder %s87, %s90
    %p96 = scmp.eq.s32.totalorder %s9, 0
    %p97 = por %p95, %p96
    %p98 = scmp.ne.s32.totalorder %s87, %s90
    %p99 = scmp.eq.s32.totalorder %s14, 4
    %p100 = por %p98, %p99
    %p101 = scmp.ne.s32.totalorder %s90, %s91
    %p102 = scmp.eq.s32.totalorder %s14, 0
    %p103 = por %p101, %p102
    %p104 = scmp.ne.s32.totalorder %s90, %s91
    %p105 = scmp.eq.s32.totalorder %s15, 4
    %p106 = por %p104, %p105
    %p108 = scmp.ne.s32.totalorder %s91, %s107
    %p109 = scmp.eq.s32.totalorder %s15, 0
    %p110 = por %p108, %p109
    %p111 = scmp.le.s32.totalorder 1, %s9
    %p112 = scmp.lt.s32.totalorder %s9, 6
    %p113 = pnand %p111, %p112
    %p114 = pneg %p113
    // Predicated region
    $region9: #{forward.4} parent=5 // pred_check
      _
    $region10: #{forward.4} parent=5 // pred_check_branch
      %116 = sbr.rel (%p113) target = $region12
    $region11: #{forward.4} parent=5 // pred_region
      %s117 = ssub.s32 %s9, 1
      // Predicated region
      $region13: #{forward.4} parent=11 // pred_check
        %p118 = pneg %p56
      $region14: #{forward.4} parent=11 // pred_check_branch
        %120 = sbr.rel (%p118) target = $region16
      $region15: #{forward.4} parent=11 // pred_region
        _
      $region16: #{forward.4} parent=11 // pred_fallthru
        _
      // Predicated region
      $region17: #{forward.4} parent=11 // pred_check
        %p121 = pneg %p77
      $region18: #{forward.4} parent=11 // pred_check_branch
        %123 = sbr.rel (%p121) target = $region20
      $region19: #{forward.4} parent=11 // pred_region
        _
      $region20: #{forward.4} parent=11 // pred_fallthru
        _
    $region12: #{forward.4} parent=5 // pred_fallthru
      _
    %p124 = scmp.lt.s32.totalorder %s9, 5
    // Predicated region
    $region21: #{forward.4} parent=5 // pred_check
      %p125 = pneg %p124
    $region22: #{forward.4} parent=5 // pred_check_branch
      %127 = sbr.rel (%p125) target = $region24
    $region23: #{forward.4} parent=5 // pred_region
      // Predicated region
      $region25: #{forward.4} parent=23 // pred_check
        %p128 = pneg %p29
      $region26: #{forward.4} parent=23 // pred_check_branch
        %130 = sbr.rel (%p128) target = $region28
      $region27: #{forward.4} parent=23 // pred_region
        %s131 = smul.u32 32, %s9
        %p132 = scmp.lt.s32.totalorder %s131, 159
        %s133 = scalar_select %p132, %s131, 159
        %s134 = smul.addr %s133, 4
        %s135 = scalar_lea.vmem %s0, %s134
        %s136 = smul.u32 32, %s9
      $region28: #{forward.4} parent=23 // pred_fallthru
        _
    $region24: #{forward.4} parent=5 // pred_fallthru
      _
    %p137 = scmp.le.s32.totalorder 1, %s9
    %p138 = scmp.lt.s32.totalorder %s9, 6
    %p139 = pnand %p137, %p138
    %p140 = pneg %p139
    // Predicated region
    $region29: #{forward.4} parent=5 // pred_check
      _
    $region30: #{forward.4} parent=5 // pred_check_branch
      %142 = sbr.rel (%p139) target = $region32
    $region31: #{forward.4} parent=5 // pred_region
      %s143 = ssub.s32 %s9, 1
      %s144 = smul.u32 32, %s14
      %p145 = scmp.lt.s32.totalorder %s144, 159
      %s146 = scalar_select %p145, %s144, 159
      %s147 = smul.addr %s146, 4
      %s148 = scalar_lea.vmem %s0, %s147
      %p149 = pneg %p35
      %p150 = pneg %p32
      %p151 = pneg %p56
      %p152 = pneg %p53
      %p153 = pneg %p77
      %p154 = pneg %p74
      %p155 = pneg %p103
      %p156 = pneg %p100
      %s157 = smul.u32 32, %s14
      %p158 = scmp.lt.s32.totalorder %s157, 159
      %s159 = scalar_select %p158, %s157, 159
      %s160 = smul.addr %s159, 8
      %s161 = scalar_lea.vmem %s3, %s160
      %s162 = smul.u32 32, %s14
      %p163 = scmp.lt.s32.totalorder %s162, 159
      %s164 = scalar_select %p163, %s162, 159
      %s165 = smul.addr %s164, 4
      %s166 = scalar_lea.vmem %s0, %s165
      %s167 = smul.u32 32, %s14
      %s168 = smul.u32 32, %s14
      %p169 = scmp.lt.s32.totalorder %s168, 159
      %s170 = scalar_select %p169, %s168, 159
      %s171 = smul.addr %s170, 8
      %s172 = scalar_lea.vmem %s3, %s171
      %s173 = smul.u32 32, %s14
      %v175 = vld [vmem:[%s166] sm:$0xf]
      %v176 = vld [vmem:[%s166 + $0x4] sm:$0xf]
      %v177 = vld [vmem:[%s166 + $0x8] sm:$0xf]
      %v178 = vld [vmem:[%s166 + $0xc] sm:$0xf]
      %v179 = vld [vmem:[%s166 + $0x10] sm:$0xf]
      %v180 = vld [vmem:[%s166 + $0x14] sm:$0xf]
      %v181 = vld [vmem:[%s166 + $0x18] sm:$0xf]
      %v182 = vld [vmem:[%s166 + $0x1c] sm:$0xf]
      %v183 = vld [vmem:[%s166 + $0x20] sm:$0xf]
      %v184 = vld [vmem:[%s166 + $0x24] sm:$0xf]
      %v185 = vld [vmem:[%s166 + $0x28] sm:$0xf]
      %v186 = vld [vmem:[%s166 + $0x2c] sm:$0xf]
      %v187 = vld [vmem:[%s166 + $0x30] sm:$0xf]
      %v188 = vld [vmem:[%s166 + $0x34] sm:$0xf]
      %v189 = vld [vmem:[%s166 + $0x38] sm:$0xf]
      %v190 = vld [vmem:[%s166 + $0x3c] sm:$0xf]
      %v191 = vld [vmem:[%s166 + $0x40] sm:$0xf]
      %v192 = vld [vmem:[%s166 + $0x44] sm:$0xf]
      %v193 = vld [vmem:[%s166 + $0x48] sm:$0xf]
      %v194 = vld [vmem:[%s166 + $0x4c] sm:$0xf]
      %v195 = vld [vmem:[%s166 + $0x50] sm:$0xf]
      %v196 = vld [vmem:[%s166 + $0x54] sm:$0xf]
      %v197 = vld [vmem:[%s166 + $0x58] sm:$0xf]
      %v198 = vld [vmem:[%s166 + $0x5c] sm:$0xf]
      %v199 = vld [vmem:[%s166 + $0x60] sm:$0xf]
      %v200 = vld [vmem:[%s166 + $0x64] sm:$0xf]
      %v201 = vld [vmem:[%s166 + $0x68] sm:$0xf]
      %v202 = vld [vmem:[%s166 + $0x6c] sm:$0xf]
      %v203 = vld [vmem:[%s166 + $0x70] sm:$0xf]
      %v204 = vld [vmem:[%s166 + $0x74] sm:$0xf]
      %v205 = vld [vmem:[%s166 + $0x78] sm:$0xf]
      %v206 = vld [vmem:[%s166 + $0x7c] sm:$0xf]
      %v207 = vld [vmem:[%s1] sm:$0xf]
      %v208 = vld [vmem:[%s1 + $0x4] sm:$0xf]
      %v209 = vld [vmem:[%s1 + $0x8] sm:$0xf]
      %v210 = vld [vmem:[%s1 + $0xc] sm:$0xf]
      %v211 = vld [vmem:[%s2] sm:$0x1]
      %v213 = vlaneseq
      %v214 = vshrl.u32 %v213, 7
      %v215 = vsub.s32 0, %v214
      %v216 = vrot.slane %v211, %v215
      %v250 = vunpack.c.l.b16 %v175
      %v251 = vunpack.c.l.b16 %v176
      %v252 = vunpack.c.l.b16 %v177
      %v253 = vunpack.c.l.b16 %v178
      %v254 = vunpack.c.l.b16 %v179
      %v255 = vunpack.c.l.b16 %v180
      %v256 = vunpack.c.l.b16 %v181
      %v257 = vunpack.c.l.b16 %v182
      %v258 = vunpack.c.l.b16 %v183
      %v259 = vunpack.c.l.b16 %v184
      %v260 = vunpack.c.l.b16 %v185
      %v261 = vunpack.c.l.b16 %v186
      %v262 = vunpack.c.l.b16 %v187
      %v263 = vunpack.c.l.b16 %v188
      %v264 = vunpack.c.l.b16 %v189
      %v265 = vunpack.c.l.b16 %v190
      %v266 = vunpack.c.l.b16 %v191
      %v267 = vunpack.c.l.b16 %v192
      %v268 = vunpack.c.l.b16 %v193
      %v269 = vunpack.c.l.b16 %v194
      %v270 = vunpack.c.l.b16 %v195
      %v271 = vunpack.c.l.b16 %v196
      %v272 = vunpack.c.l.b16 %v197
      %v273 = vunpack.c.l.b16 %v198
      %v274 = vunpack.c.l.b16 %v199
      %v275 = vunpack.c.l.b16 %v200
      %v276 = vunpack.c.l.b16 %v201
      %v277 = vunpack.c.l.b16 %v202
      %v278 = vunpack.c.l.b16 %v203
      %v279 = vunpack.c.l.b16 %v204
      %v280 = vunpack.c.l.b16 %v205
      %v281 = vunpack.c.l.b16 %v206
      %v282 = vpack.c.b16 %v251, %v250
      %v283 = vpack.c.b16 %v253, %v252
      %v284 = vpack.c.b16 %v255, %v254
      %v285 = vpack.c.b16 %v257, %v256
      %v286 = vpack.c.b16 %v259, %v258
      %v287 = vpack.c.b16 %v261, %v260
      %v288 = vpack.c.b16 %v263, %v262
      %v289 = vpack.c.b16 %v265, %v264
      %v290 = vpack.c.b16 %v267, %v266
      %v291 = vpack.c.b16 %v269, %v268
      %v292 = vpack.c.b16 %v271, %v270
      %v293 = vpack.c.b16 %v273, %v272
      %v294 = vpack.c.b16 %v275, %v274
      %v295 = vpack.c.b16 %v277, %v276
      %v296 = vpack.c.b16 %v279, %v278
      %v297 = vpack.c.b16 %v281, %v280
      %v302 = vunpack.c.l.b16 %v207
      %v303 = vunpack.c.l.b16 %v208
      %v304 = vunpack.c.l.b16 %v209
      %v305 = vunpack.c.l.b16 %v210
      %v306 = vpack.c.b16 %v303, %v302
      %v307 = vpack.c.b16 %v305, %v304
      %vm310 = vcmask 261120
      %v312 = vsel %vm310, %v282, 0
      %v315 = vsel %vm310, %v283, 0
      %v318 = vsel %vm310, %v284, 0
      %v321 = vsel %vm310, %v285, 0
      %v324 = vsel %vm310, %v286, 0
      %v327 = vsel %vm310, %v287, 0
      %v330 = vsel %vm310, %v288, 0
      %v333 = vsel %vm310, %v289, 0
      %v336 = vsel %vm310, %v290, 0
      %v339 = vsel %vm310, %v291, 0
      %v342 = vsel %vm310, %v292, 0
      %v345 = vsel %vm310, %v293, 0
      %v348 = vsel %vm310, %v294, 0
      %v351 = vsel %vm310, %v295, 0
      %v354 = vsel %vm310, %v296, 0
      %v357 = vsel %vm310, %v297, 0
      %359 = vmatprep.subr.bf16.mxu0 0
      %360 = vmatpush1.bf16.msra.mxu0 %v306
      %361 = vmatprep.subr.bf16.mxu0 0
      %362 = vmatpush1.bf16.msra.mxu0 %v307
      %363 = vmatprep.subr.bf16.mxu0 0
      %364 = vmatpush1.bf16.msra.mxu0 0
      %365 = vmatprep.subr.bf16.mxu0 0
      %366 = vmatpush1.bf16.msra.mxu0 0
      %367 = vmatprep.subr.bf16.mxu0 0
      %368 = vmatpush1.bf16.msra.mxu0 0
      %369 = vmatprep.subr.bf16.mxu0 0
      %370 = vmatpush1.bf16.msra.mxu0 0
      %371 = vmatprep.subr.bf16.mxu0 0
      %372 = vmatpush1.bf16.msra.mxu0 0
      %373 = vmatprep.subr.bf16.mxu0 0
      %374 = vmatpush1.bf16.msra.mxu0 0
      %375 = vmatprep.subr.bf16.mxu0 0
      %376 = vmatpush1.bf16.msra.mxu0 0
      %377 = vmatprep.subr.bf16.mxu0 0
      %378 = vmatpush1.bf16.msra.mxu0 0
      %379 = vmatprep.subr.bf16.mxu0 0
      %380 = vmatpush1.bf16.msra.mxu0 0
      %381 = vmatprep.subr.bf16.mxu0 0
      %382 = vmatpush1.bf16.msra.mxu0 0
      %383 = vmatprep.subr.bf16.mxu0 0
      %384 = vmatpush1.bf16.msra.mxu0 0
      %385 = vmatprep.subr.bf16.mxu0 0
      %386 = vmatpush1.bf16.msra.mxu0 0
      %387 = vmatprep.subr.bf16.mxu0 0
      %388 = vmatpush1.bf16.msra.mxu0 0
      %389 = vmatprep.subr.bf16.mxu0 0
      %390 = vmatpush1.bf16.msra.mxu0 0
      %391 = vmatprep.mubr.bf16.mxu0 0
      %392 = vmatmul.mubr.bf16.gmra.mrb[0].mxu0 %v312
      %v393 = vpop.f32.mrb[0].mxu0
      %v394 = vadd.f32 %v216, %v393
      %v395 = vpop.f32.mrb[0].mxu0
      %v396 = vpop.f32.mrb[0].mxu0
      %v397 = vadd.f32 %v216, %v396
      %v398 = vpop.f32.mrb[0].mxu0
      %399 = vmatprep.mubr.bf16.mxu0 0
      %400 = vmatmul.mubr.bf16.gmra.mrb[0].mxu0 %v315
      %v401 = vpop.f32.mrb[0].mxu0
      %v402 = vadd.f32 %v216, %v401
      %v403 = vpop.f32.mrb[0].mxu0
      %v404 = vpop.f32.mrb[0].mxu0
      %v405 = vadd.f32 %v216, %v404
      %v406 = vpop.f32.mrb[0].mxu0
      %407 = vmatprep.mubr.bf16.mxu0 0
      %408 = vmatmul.mubr.bf16.gmra.mrb[0].mxu0 %v318
      %v409 = vpop.f32.mrb[0].mxu0
      %v410 = vadd.f32 %v216, %v409
      %v411 = vpop.f32.mrb[0].mxu0
      %v412 = vpop.f32.mrb[0].mxu0
      %v413 = vadd.f32 %v216, %v412
      %v414 = vpop.f32.mrb[0].mxu0
      %415 = vmatprep.mubr.bf16.mxu0 0
      %416 = vmatmul.mubr.bf16.gmra.mrb[0].mxu0 %v321
      %v417 = vpop.f32.mrb[0].mxu0
      %v418 = vadd.f32 %v216, %v417
      %v419 = vpop.f32.mrb[0].mxu0
      %v420 = vpop.f32.mrb[0].mxu0
      %v421 = vadd.f32 %v216, %v420
      %v422 = vpop.f32.mrb[0].mxu0
      %423 = vmatprep.mubr.bf16.mxu0 0
      %424 = vmatmul.mubr.bf16.gmra.mrb[0].mxu0 %v324
      %v425 = vpop.f32.mrb[0].mxu0
      %v426 = vadd.f32 %v216, %v425
      %v427 = vpop.f32.mrb[0].mxu0
      %v428 = vpop.f32.mrb[0].mxu0
      %v429 = vadd.f32 %v216, %v428
      %v430 = vpop.f32.mrb[0].mxu0
      %431 = vmatprep.mubr.bf16.mxu0 0
      %432 = vmatmul.mubr.bf16.gmra.mrb[0].mxu0 %v327
      %v433 = vpop.f32.mrb[0].mxu0
      %v434 = vadd.f32 %v216, %v433
      %v435 = vpop.f32.mrb[0].mxu0
      %v436 = vpop.f32.mrb[0].mxu0
      %v437 = vadd.f32 %v216, %v436
      %v438 = vpop.f32.mrb[0].mxu0
      %439 = vmatprep.mubr.bf16.mxu0 0
      %440 = vmatmul.mubr.bf16.gmra.mrb[0].mxu0 %v330
      %v441 = vpop.f32.mrb[0].mxu0
      %v442 = vadd.f32 %v216, %v441
      %v443 = vpop.f32.mrb[0].mxu0
      %v444 = vpop.f32.mrb[0].mxu0
      %v445 = vadd.f32 %v216, %v444
      %v446 = vpop.f32.mrb[0].mxu0
      %447 = vmatprep.mubr.bf16.mxu0 0
      %448 = vmatmul.mubr.bf16.gmra.mrb[0].mxu0 %v333
      %v449 = vpop.f32.mrb[0].mxu0
      %v450 = vadd.f32 %v216, %v449
      %v451 = vpop.f32.mrb[0].mxu0
      %v452 = vpop.f32.mrb[0].mxu0
      %v453 = vadd.f32 %v216, %v452
      %v454 = vpop.f32.mrb[0].mxu0
      %455 = vmatprep.mubr.bf16.mxu0 0
      %456 = vmatmul.mubr.bf16.gmra.mrb[0].mxu0 %v336
      %v457 = vpop.f32.mrb[0].mxu0
      %v458 = vadd.f32 %v216, %v457
      %v459 = vpop.f32.mrb[0].mxu0
      %v460 = vpop.f32.mrb[0].mxu0
      %v461 = vadd.f32 %v216, %v460
      %v462 = vpop.f32.mrb[0].mxu0
      %463 = vmatprep.mubr.bf16.mxu0 0
      %464 = vmatmul.mubr.bf16.gmra.mrb[0].mxu0 %v339
      %v465 = vpop.f32.mrb[0].mxu0
      %v466 = vadd.f32 %v216, %v465
      %v467 = vpop.f32.mrb[0].mxu0
      %v468 = vpop.f32.mrb[0].mxu0
      %v469 = vadd.f32 %v216, %v468
      %v470 = vpop.f32.mrb[0].mxu0
      %471 = vmatprep.mubr.bf16.mxu0 0
      %472 = vmatmul.mubr.bf16.gmra.mrb[0].mxu0 %v342
      %v473 = vpop.f32.mrb[0].mxu0
      %v474 = vadd.f32 %v216, %v473
      %v475 = vpop.f32.mrb[0].mxu0
      %v476 = vpop.f32.mrb[0].mxu0
      %v477 = vadd.f32 %v216, %v476
      %v478 = vpop.f32.mrb[0].mxu0
      %479 = vmatprep.mubr.bf16.mxu0 0
      %480 = vmatmul.mubr.bf16.gmra.mrb[0].mxu0 %v345
      %v481 = vpop.f32.mrb[0].mxu0
      %v482 = vadd.f32 %v216, %v481
      %v483 = vpop.f32.mrb[0].mxu0
      %v484 = vpop.f32.mrb[0].mxu0
      %v485 = vadd.f32 %v216, %v484
      %v486 = vpop.f32.mrb[0].mxu0
      %487 = vmatprep.mubr.bf16.mxu0 0
      %488 = vmatmul.mubr.bf16.gmra.mrb[0].mxu0 %v348
      %v489 = vpop.f32.mrb[0].mxu0
      %v490 = vadd.f32 %v216, %v489
      %v491 = vpop.f32.mrb[0].mxu0
      %v492 = vpop.f32.mrb[0].mxu0
      %v493 = vadd.f32 %v216, %v492
      %v494 = vpop.f32.mrb[0].mxu0
      %495 = vmatprep.mubr.bf16.mxu0 0
      %496 = vmatmul.mubr.bf16.gmra.mrb[0].mxu0 %v351
      %v497 = vpop.f32.mrb[0].mxu0
      %v498 = vadd.f32 %v216, %v497
      %v499 = vpop.f32.mrb[0].mxu0
      %v500 = vpop.f32.mrb[0].mxu0
      %v501 = vadd.f32 %v216, %v500
      %v502 = vpop.f32.mrb[0].mxu0
      %503 = vmatprep.mubr.bf16.mxu0 0
      %504 = vmatmul.mubr.bf16.gmra.mrb[0].mxu0 %v354
      %v505 = vpop.f32.mrb[0].mxu0
      %v506 = vadd.f32 %v216, %v505
      %v507 = vpop.f32.mrb[0].mxu0
      %v508 = vpop.f32.mrb[0].mxu0
      %v509 = vadd.f32 %v216, %v508
      %v510 = vpop.f32.mrb[0].mxu0
      %511 = vmatprep.mubr.bf16.mxu0 0
      %512 = vmatmul.mubr.bf16.gmra.mrb[0].mxu0 %v357
      %v513 = vpop.f32.mrb[0].mxu0
      %v514 = vadd.f32 %v216, %v513
      %v515 = vpop.f32.mrb[0].mxu0
      %v516 = vpop.f32.mrb[0].mxu0
      %v517 = vadd.f32 %v216, %v516
      %v518 = vpop.f32.mrb[0].mxu0
      %519 = vdwg.mxu0
      %v520 = vmax.f32 %v394, 0.0
      %v521 = vmax.f32 %v397, 0.0
      %v522 = vmax.f32 %v402, 0.0
      %v523 = vmax.f32 %v405, 0.0
      %v524 = vmax.f32 %v410, 0.0
      %v525 = vmax.f32 %v413, 0.0
      %v526 = vmax.f32 %v418, 0.0
      %v527 = vmax.f32 %v421, 0.0
      %v528 = vmax.f32 %v426, 0.0
      %v529 = vmax.f32 %v429, 0.0
      %v530 = vmax.f32 %v434, 0.0
      %v531 = vmax.f32 %v437, 0.0
      %v532 = vmax.f32 %v442, 0.0
      %v533 = vmax.f32 %v445, 0.0
      %v534 = vmax.f32 %v450, 0.0
      %v535 = vmax.f32 %v453, 0.0
      %v536 = vmax.f32 %v458, 0.0
      %v537 = vmax.f32 %v461, 0.0
      %v538 = vmax.f32 %v466, 0.0
      %v539 = vmax.f32 %v469, 0.0
      %v540 = vmax.f32 %v474, 0.0
      %v541 = vmax.f32 %v477, 0.0
      %v542 = vmax.f32 %v482, 0.0
      %v543 = vmax.f32 %v485, 0.0
      %v544 = vmax.f32 %v490, 0.0
      %v545 = vmax.f32 %v493, 0.0
      %v546 = vmax.f32 %v498, 0.0
      %v547 = vmax.f32 %v501, 0.0
      %v548 = vmax.f32 %v506, 0.0
      %v549 = vmax.f32 %v509, 0.0
      %v550 = vmax.f32 %v514, 0.0
      %v551 = vmax.f32 %v517, 0.0
      %552 = vst [vmem:[%s172] sm:$0xff] %v520
      %553 = vst [vmem:[%s172 + $0x8] sm:$0xff] %v521
      %554 = vst [vmem:[%s172 + $0x10] sm:$0xff] %v522
      %555 = vst [vmem:[%s172 + $0x18] sm:$0xff] %v523
      %556 = vst [vmem:[%s172 + $0x20] sm:$0xff] %v524
      %557 = vst [vmem:[%s172 + $0x28] sm:$0xff] %v525
      %558 = vst [vmem:[%s172 + $0x30] sm:$0xff] %v526
      %559 = vst [vmem:[%s172 + $0x38] sm:$0xff] %v527
      %560 = vst [vmem:[%s172 + $0x40] sm:$0xff] %v528
      %561 = vst [vmem:[%s172 + $0x48] sm:$0xff] %v529
      %562 = vst [vmem:[%s172 + $0x50] sm:$0xff] %v530
      %563 = vst [vmem:[%s172 + $0x58] sm:$0xff] %v531
      %564 = vst [vmem:[%s172 + $0x60] sm:$0xff] %v532
      %565 = vst [vmem:[%s172 + $0x68] sm:$0xff] %v533
      %566 = vst [vmem:[%s172 + $0x70] sm:$0xff] %v534
      %567 = vst [vmem:[%s172 + $0x78] sm:$0xff] %v535
      %568 = vst [vmem:[%s172 + $0x80] sm:$0xff] %v536
      %569 = vst [vmem:[%s172 + $0x88] sm:$0xff] %v537
      %570 = vst [vmem:[%s172 + $0x90] sm:$0xff] %v538
      %571 = vst [vmem:[%s172 + $0x98] sm:$0xff] %v539
      %572 = vst [vmem:[%s172 + $0xa0] sm:$0xff] %v540
      %573 = vst [vmem:[%s172 + $0xa8] sm:$0xff] %v541
      %574 = vst [vmem:[%s172 + $0xb0] sm:$0xff] %v542
      %575 = vst [vmem:[%s172 + $0xb8] sm:$0xff] %v543
      %576 = vst [vmem:[%s172 + $0xc0] sm:$0xff] %v544
      %577 = vst [vmem:[%s172 + $0xc8] sm:$0xff] %v545
      %578 = vst [vmem:[%s172 + $0xd0] sm:$0xff] %v546
      %579 = vst [vmem:[%s172 + $0xd8] sm:$0xff] %v547
      %580 = vst [vmem:[%s172 + $0xe0] sm:$0xff] %v548
      %581 = vst [vmem:[%s172 + $0xe8] sm:$0xff] %v549
      %582 = vst [vmem:[%s172 + $0xf0] sm:$0xff] %v550
      %583 = vst [vmem:[%s172 + $0xf8] sm:$0xff] %v551
      %s584 = smul.u32 32, %s14
      %p585 = scmp.lt.s32.totalorder %s584, 159
      %s586 = scalar_select %p585, %s584, 159
      %s587 = smul.addr %s586, 8
      %s588 = scalar_lea.vmem %s3, %s587
      // Predicated region
      $region33: #{forward.4} parent=31 // pred_check
        %p589 = pneg %p100
      $region34: #{forward.4} parent=31 // pred_check_branch
        %591 = sbr.rel (%p589) target = $region36
      $region35: #{forward.4} parent=31 // pred_region
        %s592 = smul.u32 32, %s14
      $region36: #{forward.4} parent=31 // pred_fallthru
        _
    $region32: #{forward.4} parent=5 // pred_fallthru
      _
    %p593 = scmp.le.s32.totalorder 2, %s9
    // Predicated region
    $region37: #{forward.4} parent=5 // pred_check
      %p594 = pneg %p593
    $region38: #{forward.4} parent=5 // pred_check_branch
      %596 = sbr.rel (%p594) target = $region40
    $region39: #{forward.4} parent=5 // pred_region
      %s597 = ssub.s32 %s9, 2
      // Predicated region
      $region41: #{forward.4} parent=39 // pred_check
        %p598 = pneg %p106
      $region42: #{forward.4} parent=39 // pred_check_branch
        %600 = sbr.rel (%p598) target = $region44
      $region43: #{forward.4} parent=39 // pred_region
        %s601 = smul.u32 32, %s15
        %p602 = scmp.lt.s32.totalorder %s601, 159
        %s603 = scalar_select %p602, %s601, 159
        %s604 = smul.addr %s603, 8
        %s605 = scalar_lea.vmem %s3, %s604
      $region44: #{forward.4} parent=39 // pred_fallthru
        _
    $region40: #{forward.4} parent=5 // pred_fallthru
      _
  $region6: #{forward.4} parent=0 // loop_footer
    %s13 = sadd.s32 1, %s9
  $region7: #{forward.4} parent=0 // loop_footer_branch
    %8 = sbr.rel target = $region3
  $region8: #{forward.4} parent=0 // loop_exit
    _

// kernel: forward.5
$region0: #{forward.5}
  #allocation0 [shape = 'u32[]', space=smem, size = 0x4, offset = 0x4, fixed_abs, tag = 'smem constant byte address 0x4 - core index']
  #allocation1 [shape = 'u32[144,128]{1,0:T(1,128)}', space=vmem, size = 0x12000, scoped, tag = 'internal scratch']
  %s0 = inlined_call_operand.vmem [shape: bf16[128,512], index: 0, kind: input, shape index: {}]
  %s1 = inlined_call_operand.vmem [shape: bf16[512,128], index: 1, kind: input, shape index: {}]
  %s2 = inlined_call_operand.vmem [shape: f32[1,128], index: 2, kind: input, shape index: {}]
  %s3 = inlined_call_operand.vmem [shape: f32[128,128], index: 3, kind: output, shape index: {}]
  %s4 = sld [smem:[#allocation0]]
  $region22: #{forward.5} parent=0
    _
  %s6 = ssub.s32 1, %s4
  %s7 = scalar_select 0, %s6, %s4
  // Predicated region
  $region2: #{forward.5} parent=0 // pred_check
    _
  $region3: #{forward.5} parent=0 // pred_check_branch
    %9 = sbr.rel (0) target = $region5
  $region4: #{forward.5} parent=0 // pred_region
    _
  $region5: #{forward.5} parent=0 // pred_fallthru
    _
  // Predicated region
  $region6: #{forward.5} parent=0 // pred_check
    _
  $region7: #{forward.5} parent=0 // pred_check_branch
    %11 = sbr.rel (0) target = $region9
  $region8: #{forward.5} parent=0 // pred_region
    _
  $region9: #{forward.5} parent=0 // pred_fallthru
    _
  // Predicated region
  $region10: #{forward.5} parent=0 // pred_check
    _
  $region11: #{forward.5} parent=0 // pred_check_branch
    %13 = sbr.rel (0) target = $region13
  $region12: #{forward.5} parent=0 // pred_region
    _
  $region13: #{forward.5} parent=0 // pred_fallthru
    _
  %v15 = vld [vmem:[%s0] sm:$0xff]
  %v16 = vld [vmem:[%s0 + $0x8] sm:$0xff]
  %v17 = vld [vmem:[%s0 + $0x10] sm:$0xff]
  %v18 = vld [vmem:[%s0 + $0x18] sm:$0xff]
  %v19 = vld [vmem:[%s0 + $0x20] sm:$0xff]
  %v20 = vld [vmem:[%s0 + $0x28] sm:$0xff]
  %v21 = vld [vmem:[%s0 + $0x30] sm:$0xff]
  %v22 = vld [vmem:[%s0 + $0x38] sm:$0xff]
  %v23 = vld [vmem:[%s0 + $0x40] sm:$0xff]
  %v24 = vld [vmem:[%s0 + $0x48] sm:$0xff]
  %v25 = vld [vmem:[%s0 + $0x50] sm:$0xff]
  %v26 = vld [vmem:[%s0 + $0x58] sm:$0xff]
  %v27 = vld [vmem:[%s0 + $0x60] sm:$0xff]
  %v28 = vld [vmem:[%s0 + $0x68] sm:$0xff]
  %v29 = vld [vmem:[%s0 + $0x70] sm:$0xff]
  %v30 = vld [vmem:[%s0 + $0x78] sm:$0xff]
  %v31 = vld [vmem:[%s0 + $0x80] sm:$0xff]
  %v32 = vld [vmem:[%s0 + $0x88] sm:$0xff]
  %v33 = vld [vmem:[%s0 + $0x90] sm:$0xff]
  %v34 = vld [vmem:[%s0 + $0x98] sm:$0xff]
  %v35 = vld [vmem:[%s0 + $0xa0] sm:$0xff]
  %v36 = vld [vmem:[%s0 + $0xa8] sm:$0xff]
  %v37 = vld [vmem:[%s0 + $0xb0] sm:$0xff]
  %v38 = vld [vmem:[%s0 + $0xb8] sm:$0xff]
  %v39 = vld [vmem:[%s0 + $0xc0] sm:$0xff]
  %v40 = vld [vmem:[%s0 + $0xc8] sm:$0xff]
  %v41 = vld [vmem:[%s0 + $0xd0] sm:$0xff]
  %v42 = vld [vmem:[%s0 + $0xd8] sm:$0xff]
  %v43 = vld [vmem:[%s0 + $0xe0] sm:$0xff]
  %v44 = vld [vmem:[%s0 + $0xe8] sm:$0xff]
  %v45 = vld [vmem:[%s0 + $0xf0] sm:$0xff]
  %v46 = vld [vmem:[%s0 + $0xf8] sm:$0xff]
  %v47 = vld [vmem:[%s1] sm:$0xf]
  %v48 = vld [vmem:[%s1 + $0x4] sm:$0xf]
  %v49 = vld [vmem:[%s1 + $0x8] sm:$0xf]
  %v50 = vld [vmem:[%s1 + $0xc] sm:$0xf]
  %v51 = vld [vmem:[%s1 + $0x10] sm:$0xf]
  %v52 = vld [vmem:[%s1 + $0x14] sm:$0xf]
  %v53 = vld [vmem:[%s1 + $0x18] sm:$0xf]
  %v54 = vld [vmem:[%s1 + $0x1c] sm:$0xf]
  %v55 = vld [vmem:[%s1 + $0x20] sm:$0xf]
  %v56 = vld [vmem:[%s1 + $0x24] sm:$0xf]
  %v57 = vld [vmem:[%s1 + $0x28] sm:$0xf]
  %v58 = vld [vmem:[%s1 + $0x2c] sm:$0xf]
  %v59 = vld [vmem:[%s1 + $0x30] sm:$0xf]
  %v60 = vld [vmem:[%s1 + $0x34] sm:$0xf]
  %v61 = vld [vmem:[%s1 + $0x38] sm:$0xf]
  %v62 = vld [vmem:[%s1 + $0x3c] sm:$0xf]
  %v63 = vld [vmem:[%s1 + $0x40] sm:$0xf]
  %v64 = vld [vmem:[%s1 + $0x44] sm:$0xf]
  %v65 = vld [vmem:[%s1 + $0x48] sm:$0xf]
  %v66 = vld [vmem:[%s1 + $0x4c] sm:$0xf]
  %v67 = vld [vmem:[%s1 + $0x50] sm:$0xf]
  %v68 = vld [vmem:[%s1 + $0x54] sm:$0xf]
  %v69 = vld [vmem:[%s1 + $0x58] sm:$0xf]
  %v70 = vld [vmem:[%s1 + $0x5c] sm:$0xf]
  %v71 = vld [vmem:[%s1 + $0x60] sm:$0xf]
  %v72 = vld [vmem:[%s1 + $0x64] sm:$0xf]
  %v73 = vld [vmem:[%s1 + $0x68] sm:$0xf]
  %v74 = vld [vmem:[%s1 + $0x6c] sm:$0xf]
  %v75 = vld [vmem:[%s1 + $0x70] sm:$0xf]
  %v76 = vld [vmem:[%s1 + $0x74] sm:$0xf]
  %v77 = vld [vmem:[%s1 + $0x78] sm:$0xf]
  %v78 = vld [vmem:[%s1 + $0x7c] sm:$0xf]
  %v79 = vld [vmem:[%s1 + $0x80] sm:$0xf]
  %v80 = vld [vmem:[%s1 + $0x84] sm:$0xf]
  %v81 = vld [vmem:[%s1 + $0x88] sm:$0xf]
  %v82 = vld [vmem:[%s1 + $0x8c] sm:$0xf]
  %v83 = vld [vmem:[%s1 + $0x90] sm:$0xf]
  %v84 = vld [vmem:[%s1 + $0x94] sm:$0xf]
  %v85 = vld [vmem:[%s1 + $0x98] sm:$0xf]
  %v86 = vld [vmem:[%s1 + $0x9c] sm:$0xf]
  %v87 = vld [vmem:[%s1 + $0xa0] sm:$0xf]
  %v88 = vld [vmem:[%s1 + $0xa4] sm:$0xf]
  %v89 = vld [vmem:[%s1 + $0xa8] sm:$0xf]
  %v90 = vld [vmem:[%s1 + $0xac] sm:$0xf]
  %v91 = vld [vmem:[%s1 + $0xb0] sm:$0xf]
  %v92 = vld [vmem:[%s1 + $0xb4] sm:$0xf]
  %v93 = vld [vmem:[%s1 + $0xb8] sm:$0xf]
  %v94 = vld [vmem:[%s1 + $0xbc] sm:$0xf]
  %v95 = vld [vmem:[%s1 + $0xc0] sm:$0xf]
  %v96 = vld [vmem:[%s1 + $0xc4] sm:$0xf]
  %v97 = vld [vmem:[%s1 + $0xc8] sm:$0xf]
  %v98 = vld [vmem:[%s1 + $0xcc] sm:$0xf]
  %v99 = vld [vmem:[%s1 + $0xd0] sm:$0xf]
  %v100 = vld [vmem:[%s1 + $0xd4] sm:$0xf]
  %v101 = vld [vmem:[%s1 + $0xd8] sm:$0xf]
  %v102 = vld [vmem:[%s1 + $0xdc] sm:$0xf]
  %v103 = vld [vmem:[%s1 + $0xe0] sm:$0xf]
  %v104 = vld [vmem:[%s1 + $0xe4] sm:$0xf]
  %v105 = vld [vmem:[%s1 + $0xe8] sm:$0xf]
  %v106 = vld [vmem:[%s1 + $0xec] sm:$0xf]
  %v107 = vld [vmem:[%s1 + $0xf0] sm:$0xf]
  %v108 = vld [vmem:[%s1 + $0xf4] sm:$0xf]
  %v109 = vld [vmem:[%s1 + $0xf8] sm:$0xf]
  %v110 = vld [vmem:[%s1 + $0xfc] sm:$0xf]
  %v111 = vld [vmem:[%s2] sm:$0x1]
  %v113 = vlaneseq
  %v114 = vshrl.u32 %v113, 7
  %v115 = vsub.s32 0, %v114
  %v116 = vrot.slane %v111, %v115
  %v150 = vunpack.c.l.b16 %v15
  %v151 = vunpack.c.h.b16 %v15
  %v152 = vunpack.c.l.b16 %v16
  %v153 = vunpack.c.h.b16 %v16
  %v154 = vunpack.c.l.b16 %v17
  %v155 = vunpack.c.h.b16 %v17
  %v156 = vunpack.c.l.b16 %v18
  %v157 = vunpack.c.h.b16 %v18
  %v158 = vunpack.c.l.b16 %v19
  %v159 = vunpack.c.h.b16 %v19
  %v160 = vunpack.c.l.b16 %v20
  %v161 = vunpack.c.h.b16 %v20
  %v162 = vunpack.c.l.b16 %v21
  %v163 = vunpack.c.h.b16 %v21
  %v164 = vunpack.c.l.b16 %v22
  %v165 = vunpack.c.h.b16 %v22
  %v166 = vunpack.c.l.b16 %v23
  %v167 = vunpack.c.h.b16 %v23
  %v168 = vunpack.c.l.b16 %v24
  %v169 = vunpack.c.h.b16 %v24
  %v170 = vunpack.c.l.b16 %v25
  %v171 = vunpack.c.h.b16 %v25
  %v172 = vunpack.c.l.b16 %v26
  %v173 = vunpack.c.h.b16 %v26
  %v174 = vunpack.c.l.b16 %v27
  %v175 = vunpack.c.h.b16 %v27
  %v176 = vunpack.c.l.b16 %v28
  %v177 = vunpack.c.h.b16 %v28
  %v178 = vunpack.c.l.b16 %v29
  %v179 = vunpack.c.h.b16 %v29
  %v180 = vunpack.c.l.b16 %v30
  %v181 = vunpack.c.h.b16 %v30
  %v182 = vunpack.c.l.b16 %v31
  %v183 = vunpack.c.h.b16 %v31
  %v184 = vunpack.c.l.b16 %v32
  %v185 = vunpack.c.h.b16 %v32
  %v186 = vunpack.c.l.b16 %v33
  %v187 = vunpack.c.h.b16 %v33
  %v188 = vunpack.c.l.b16 %v34
  %v189 = vunpack.c.h.b16 %v34
  %v190 = vunpack.c.l.b16 %v35
  %v191 = vunpack.c.h.b16 %v35
  %v192 = vunpack.c.l.b16 %v36
  %v193 = vunpack.c.h.b16 %v36
  %v194 = vunpack.c.l.b16 %v37
  %v195 = vunpack.c.h.b16 %v37
  %v196 = vunpack.c.l.b16 %v38
  %v197 = vunpack.c.h.b16 %v38
  %v198 = vunpack.c.l.b16 %v39
  %v199 = vunpack.c.h.b16 %v39
  %v200 = vunpack.c.l.b16 %v40
  %v201 = vunpack.c.h.b16 %v40
  %v202 = vunpack.c.l.b16 %v41
  %v203 = vunpack.c.h.b16 %v41
  %v204 = vunpack.c.l.b16 %v42
  %v205 = vunpack.c.h.b16 %v42
  %v206 = vunpack.c.l.b16 %v43
  %v207 = vunpack.c.h.b16 %v43
  %v208 = vunpack.c.l.b16 %v44
  %v209 = vunpack.c.h.b16 %v44
  %v210 = vunpack.c.l.b16 %v45
  %v211 = vunpack.c.h.b16 %v45
  %v212 = vunpack.c.l.b16 %v46
  %v213 = vunpack.c.h.b16 %v46
  %v214 = vpack.c.b16 %v154, %v150
  %v215 = vpack.c.b16 %v155, %v151
  %v216 = vpack.c.b16 %v156, %v152
  %v217 = vpack.c.b16 %v157, %v153
  %v218 = vpack.c.b16 %v162, %v158
  %v219 = vpack.c.b16 %v163, %v159
  %v220 = vpack.c.b16 %v164, %v160
  %v221 = vpack.c.b16 %v165, %v161
  %v222 = vpack.c.b16 %v170, %v166
  %v223 = vpack.c.b16 %v171, %v167
  %v224 = vpack.c.b16 %v172, %v168
  %v225 = vpack.c.b16 %v173, %v169
  %v226 = vpack.c.b16 %v178, %v174
  %v227 = vpack.c.b16 %v179, %v175
  %v228 = vpack.c.b16 %v180, %v176
  %v229 = vpack.c.b16 %v181, %v177
  %v230 = vpack.c.b16 %v186, %v182
  %v231 = vpack.c.b16 %v187, %v183
  %v232 = vpack.c.b16 %v188, %v184
  %v233 = vpack.c.b16 %v189, %v185
  %v234 = vpack.c.b16 %v194, %v190
  %v235 = vpack.c.b16 %v195, %v191
  %v236 = vpack.c.b16 %v196, %v192
  %v237 = vpack.c.b16 %v197, %v193
  %v238 = vpack.c.b16 %v202, %v198
  %v239 = vpack.c.b16 %v203, %v199
  %v240 = vpack.c.b16 %v204, %v200
  %v241 = vpack.c.b16 %v205, %v201
  %v242 = vpack.c.b16 %v210, %v206
  %v243 = vpack.c.b16 %v211, %v207
  %v244 = vpack.c.b16 %v212, %v208
  %v245 = vpack.c.b16 %v213, %v209
  %v342 = vunpack.c.l.b16 %v47
  %v343 = vunpack.c.l.b16 %v48
  %v344 = vunpack.c.l.b16 %v49
  %v345 = vunpack.c.l.b16 %v50
  %v346 = vunpack.c.l.b16 %v51
  %v347 = vunpack.c.l.b16 %v52
  %v348 = vunpack.c.l.b16 %v53
  %v349 = vunpack.c.l.b16 %v54
  %v350 = vunpack.c.l.b16 %v55
  %v351 = vunpack.c.l.b16 %v56
  %v352 = vunpack.c.l.b16 %v57
  %v353 = vunpack.c.l.b16 %v58
  %v354 = vunpack.c.l.b16 %v59
  %v355 = vunpack.c.l.b16 %v60
  %v356 = vunpack.c.l.b16 %v61
  %v357 = vunpack.c.l.b16 %v62
  %v358 = vunpack.c.l.b16 %v63
  %v359 = vunpack.c.l.b16 %v64
  %v360 = vunpack.c.l.b16 %v65
  %v361 = vunpack.c.l.b16 %v66
  %v362 = vunpack.c.l.b16 %v67
  %v363 = vunpack.c.l.b16 %v68
  %v364 = vunpack.c.l.b16 %v69
  %v365 = vunpack.c.l.b16 %v70
  %v366 = vunpack.c.l.b16 %v71
  %v367 = vunpack.c.l.b16 %v72
  %v368 = vunpack.c.l.b16 %v73
  %v369 = vunpack.c.l.b16 %v74
  %v370 = vunpack.c.l.b16 %v75
  %v371 = vunpack.c.l.b16 %v76
  %v372 = vunpack.c.l.b16 %v77
  %v373 = vunpack.c.l.b16 %v78
  %v374 = vunpack.c.l.b16 %v79
  %v375 = vunpack.c.l.b16 %v80
  %v376 = vunpack.c.l.b16 %v81
  %v377 = vunpack.c.l.b16 %v82
  %v378 = vunpack.c.l.b16 %v83
  %v379 = vunpack.c.l.b16 %v84
  %v380 = vunpack.c.l.b16 %v85
  %v381 = vunpack.c.l.b16 %v86
  %v382 = vunpack.c.l.b16 %v87
  %v383 = vunpack.c.l.b16 %v88
  %v384 = vunpack.c.l.b16 %v89
  %v385 = vunpack.c.l.b16 %v90
  %v386 = vunpack.c.l.b16 %v91
  %v387 = vunpack.c.l.b16 %v92
  %v388 = vunpack.c.l.b16 %v93
  %v389 = vunpack.c.l.b16 %v94
  %v390 = vunpack.c.l.b16 %v95
  %v391 = vunpack.c.l.b16 %v96
  %v392 = vunpack.c.l.b16 %v97
  %v393 = vunpack.c.l.b16 %v98
  %v394 = vunpack.c.l.b16 %v99
  %v395 = vunpack.c.l.b16 %v100
  %v396 = vunpack.c.l.b16 %v101
  %v397 = vunpack.c.l.b16 %v102
  %v398 = vunpack.c.l.b16 %v103
  %v399 = vunpack.c.l.b16 %v104
  %v400 = vunpack.c.l.b16 %v105
  %v401 = vunpack.c.l.b16 %v106
  %v402 = vunpack.c.l.b16 %v107
  %v403 = vunpack.c.l.b16 %v108
  %v404 = vunpack.c.l.b16 %v109
  %v405 = vunpack.c.l.b16 %v110
  %v406 = vpack.c.b16 %v343, %v342
  %v407 = vpack.c.b16 %v345, %v344
  %v408 = vpack.c.b16 %v347, %v346
  %v409 = vpack.c.b16 %v349, %v348
  %v410 = vpack.c.b16 %v351, %v350
  %v411 = vpack.c.b16 %v353, %v352
  %v412 = vpack.c.b16 %v355, %v354
  %v413 = vpack.c.b16 %v357, %v356
  %v414 = vpack.c.b16 %v359, %v358
  %v415 = vpack.c.b16 %v361, %v360
  %v416 = vpack.c.b16 %v363, %v362
  %v417 = vpack.c.b16 %v365, %v364
  %v418 = vpack.c.b16 %v367, %v366
  %v419 = vpack.c.b16 %v369, %v368
  %v420 = vpack.c.b16 %v371, %v370
  %v421 = vpack.c.b16 %v373, %v372
  %v422 = vpack.c.b16 %v375, %v374
  %v423 = vpack.c.b16 %v377, %v376
  %v424 = vpack.c.b16 %v379, %v378
  %v425 = vpack.c.b16 %v381, %v380
  %v426 = vpack.c.b16 %v383, %v382
  %v427 = vpack.c.b16 %v385, %v384
  %v428 = vpack.c.b16 %v387, %v386
  %v429 = vpack.c.b16 %v389, %v388
  %v430 = vpack.c.b16 %v391, %v390
  %v431 = vpack.c.b16 %v393, %v392
  %v432 = vpack.c.b16 %v395, %v394
  %v433 = vpack.c.b16 %v397, %v396
  %v434 = vpack.c.b16 %v399, %v398
  %v435 = vpack.c.b16 %v401, %v400
  %v436 = vpack.c.b16 %v403, %v402
  %v437 = vpack.c.b16 %v405, %v404
  %470 = vmatprep.subr.bf16.mxu0 0
  %471 = vmatpush1.bf16.msra.mxu0 %v406
  %472 = vmatprep.subr.bf16.mxu0 0
  %473 = vmatpush1.bf16.msra.mxu0 %v407
  %474 = vmatprep.subr.bf16.mxu0 0
  %475 = vmatpush1.bf16.msra.mxu0 %v408
  %476 = vmatprep.subr.bf16.mxu0 0
  %477 = vmatpush1.bf16.msra.mxu0 %v409
  %478 = vmatprep.subr.bf16.mxu0 0
  %479 = vmatpush1.bf16.msra.mxu0 %v410
  %480 = vmatprep.subr.bf16.mxu0 0
  %481 = vmatpush1.bf16.msra.mxu0 %v411
  %482 = vmatprep.subr.bf16.mxu0 0
  %483 = vmatpush1.bf16.msra.mxu0 %v412
  %484 = vmatprep.subr.bf16.mxu0 0
  %485 = vmatpush1.bf16.msra.mxu0 %v413
  %486 = vmatprep.subr.bf16.mxu0 0
  %487 = vmatpush1.bf16.msra.mxu0 %v414
  %488 = vmatprep.subr.bf16.mxu0 0
  %489 = vmatpush1.bf16.msra.mxu0 %v415
  %490 = vmatprep.subr.bf16.mxu0 0
  %491 = vmatpush1.bf16.msra.mxu0 %v416
  %492 = vmatprep.subr.bf16.mxu0 0
  %493 = vmatpush1.bf16.msra.mxu0 %v417
  %494 = vmatprep.subr.bf16.mxu0 0
  %495 = vmatpush1.bf16.msra.mxu0 %v418
  %496 = vmatprep.subr.bf16.mxu0 0
  %497 = vmatpush1.bf16.msra.mxu0 %v419
  %498 = vmatprep.subr.bf16.mxu0 0
  %499 = vmatpush1.bf16.msra.mxu0 %v420
  %500 = vmatprep.subr.bf16.mxu0 0
  %501 = vmatpush1.bf16.msra.mxu0 %v421
  %502 = vmatprep.mubr.bf16.mxu0 %v215
  %503 = vmatmul.mubr.bf16.gmra.mrb[0].mxu0 %v214
  %v504 = vpop.f32.mrb[0].mxu0
  %v505 = vadd.f32 %v116, %v504
  %v506 = vpop.f32.mrb[0].mxu0
  %v507 = vpop.f32.mrb[0].mxu0
  %v508 = vadd.f32 %v116, %v507
  %v509 = vpop.f32.mrb[0].mxu0
  %510 = vmatprep.mubr.bf16.mxu0 %v219
  %511 = vmatmul.mubr.bf16.gmra.mrb[0].mxu0 %v218
  %v512 = vpop.f32.mrb[0].mxu0
  %v513 = vadd.f32 %v116, %v512
  %v514 = vpop.f32.mrb[0].mxu0
  %v515 = vpop.f32.mrb[0].mxu0
  %v516 = vadd.f32 %v116, %v515
  %v517 = vpop.f32.mrb[0].mxu0
  %518 = vmatprep.mubr.bf16.mxu0 %v223
  %519 = vmatmul.mubr.bf16.gmra.mrb[0].mxu0 %v222
  %v520 = vpop.f32.mrb[0].mxu0
  %v521 = vadd.f32 %v116, %v520
  %v522 = vpop.f32.mrb[0].mxu0
  %v523 = vpop.f32.mrb[0].mxu0
  %v524 = vadd.f32 %v116, %v523
  %v525 = vpop.f32.mrb[0].mxu0
  %526 = vmatprep.mubr.bf16.mxu0 %v227
  %527 = vmatmul.mubr.bf16.gmra.mrb[0].mxu0 %v226
  %v528 = vpop.f32.mrb[0].mxu0
  %v529 = vadd.f32 %v116, %v528
  %v530 = vpop.f32.mrb[0].mxu0
  %v531 = vpop.f32.mrb[0].mxu0
  %v532 = vadd.f32 %v116, %v531
  %v533 = vpop.f32.mrb[0].mxu0
  %534 = vmatprep.mubr.bf16.mxu0 %v231
  %535 = vmatmul.mubr.bf16.gmra.mrb[0].mxu0 %v230
  %v536 = vpop.f32.mrb[0].mxu0
  %v537 = vadd.f32 %v116, %v536
  %v538 = vpop.f32.mrb[0].mxu0
  %v539 = vpop.f32.mrb[0].mxu0
  %v540 = vadd.f32 %v116, %v539
  %v541 = vpop.f32.mrb[0].mxu0
  %542 = vmatprep.mubr.bf16.mxu0 %v235
  %543 = vmatmul.mubr.bf16.gmra.mrb[0].mxu0 %v234
  %v544 = vpop.f32.mrb[0].mxu0
  %v545 = vadd.f32 %v116, %v544
  %v546 = vpop.f32.mrb[0].mxu0
  %v547 = vpop.f32.mrb[0].mxu0
  %v548 = vadd.f32 %v116, %v547
  %v549 = vpop.f32.mrb[0].mxu0
  %550 = vmatprep.mubr.bf16.mxu0 %v239
  %551 = vmatmul.mubr.bf16.gmra.mrb[0].mxu0 %v238
  %v552 = vpop.f32.mrb[0].mxu0
  %v553 = vadd.f32 %v116, %v552
  %v554 = vpop.f32.mrb[0].mxu0
  %v555 = vpop.f32.mrb[0].mxu0
  %v556 = vadd.f32 %v116, %v555
  %v557 = vpop.f32.mrb[0].mxu0
  %558 = vmatprep.mubr.bf16.mxu0 %v243
  %559 = vmatmul.mubr.bf16.gmra.mrb[0].mxu0 %v242
  %v560 = vpop.f32.mrb[0].mxu0
  %v561 = vadd.f32 %v116, %v560
  %v562 = vpop.f32.mrb[0].mxu0
  %v563 = vpop.f32.mrb[0].mxu0
  %v564 = vadd.f32 %v116, %v563
  %v565 = vpop.f32.mrb[0].mxu0
  %566 = vdwg.mxu0
  %567 = vmatprep.subr.bf16.mxu0 0
  %568 = vmatpush1.bf16.msra.mxu0 %v422
  %569 = vmatprep.subr.bf16.mxu0 0
  %570 = vmatpush1.bf16.msra.mxu0 %v423
  %571 = vmatprep.subr.bf16.mxu0 0
  %572 = vmatpush1.bf16.msra.mxu0 %v424
  %573 = vmatprep.subr.bf16.mxu0 0
  %574 = vmatpush1.bf16.msra.mxu0 %v425
  %575 = vmatprep.subr.bf16.mxu0 0
  %576 = vmatpush1.bf16.msra.mxu0 %v426
  %577 = vmatprep.subr.bf16.mxu0 0
  %578 = vmatpush1.bf16.msra.mxu0 %v427
  %579 = vmatprep.subr.bf16.mxu0 0
  %580 = vmatpush1.bf16.msra.mxu0 %v428
  %581 = vmatprep.subr.bf16.mxu0 0
  %582 = vmatpush1.bf16.msra.mxu0 %v429
  %583 = vmatprep.subr.bf16.mxu0 0
  %584 = vmatpush1.bf16.msra.mxu0 %v430
  %585 = vmatprep.subr.bf16.mxu0 0
  %586 = vmatpush1.bf16.msra.mxu0 %v431
  %587 = vmatprep.subr.bf16.mxu0 0
  %588 = vmatpush1.bf16.msra.mxu0 %v432
  %589 = vmatprep.subr.bf16.mxu0 0
  %590 = vmatpush1.bf16.msra.mxu0 %v433
  %591 = vmatprep.subr.bf16.mxu0 0
  %592 = vmatpush1.bf16.msra.mxu0 %v434
  %593 = vmatprep.subr.bf16.mxu0 0
  %594 = vmatpush1.bf16.msra.mxu0 %v435
  %595 = vmatprep.subr.bf16.mxu0 0
  %596 = vmatpush1.bf16.msra.mxu0 %v436
  %597 = vmatprep.subr.bf16.mxu0 0
  %598 = vmatpush1.bf16.msra.mxu0 %v437
  %599 = vmatprep.mubr.bf16.mxu0 %v217
  %600 = vmatmul.mubr.bf16.gmra.mrb[0].mxu0 %v216
  %v601 = vpop.f32.mrb[0].mxu0
  %v602 = vadd.f32 %v505, %v601
  %v603 = vpop.f32.mrb[0].mxu0
  %v604 = vpop.f32.mrb[0].mxu0
  %v605 = vadd.f32 %v508, %v604
  %v606 = vpop.f32.mrb[0].mxu0
  %607 = vmatprep.mubr.bf16.mxu0 %v221
  %608 = vmatmul.mubr.bf16.gmra.mrb[0].mxu0 %v220
  %v609 = vpop.f32.mrb[0].mxu0
  %v610 = vadd.f32 %v513, %v609
  %v611 = vpop.f32.mrb[0].mxu0
  %v612 = vpop.f32.mrb[0].mxu0
  %v613 = vadd.f32 %v516, %v612
  %v614 = vpop.f32.mrb[0].mxu0
  %615 = vmatprep.mubr.bf16.mxu0 %v225
  %616 = vmatmul.mubr.bf16.gmra.mrb[0].mxu0 %v224
  %v617 = vpop.f32.mrb[0].mxu0
  %v618 = vadd.f32 %v521, %v617
  %v619 = vpop.f32.mrb[0].mxu0
  %v620 = vpop.f32.mrb[0].mxu0
  %v621 = vadd.f32 %v524, %v620
  %v622 = vpop.f32.mrb[0].mxu0
  %623 = vmatprep.mubr.bf16.mxu0 %v229
  %624 = vmatmul.mubr.bf16.gmra.mrb[0].mxu0 %v228
  %v625 = vpop.f32.mrb[0].mxu0
  %v626 = vadd.f32 %v529, %v625
  %v627 = vpop.f32.mrb[0].mxu0
  %v628 = vpop.f32.mrb[0].mxu0
  %v629 = vadd.f32 %v532, %v628
  %v630 = vpop.f32.mrb[0].mxu0
  %631 = vmatprep.mubr.bf16.mxu0 %v233
  %632 = vmatmul.mubr.bf16.gmra.mrb[0].mxu0 %v232
  %v633 = vpop.f32.mrb[0].mxu0
  %v634 = vadd.f32 %v537, %v633
  %v635 = vpop.f32.mrb[0].mxu0
  %v636 = vpop.f32.mrb[0].mxu0
  %v637 = vadd.f32 %v540, %v636
  %v638 = vpop.f32.mrb[0].mxu0
  %639 = vmatprep.mubr.bf16.mxu0 %v237
  %640 = vmatmul.mubr.bf16.gmra.mrb[0].mxu0 %v236
  %v641 = vpop.f32.mrb[0].mxu0
  %v642 = vadd.f32 %v545, %v641
  %v643 = vpop.f32.mrb[0].mxu0
  %v644 = vpop.f32.mrb[0].mxu0
  %v645 = vadd.f32 %v548, %v644
  %v646 = vpop.f32.mrb[0].mxu0
  %647 = vmatprep.mubr.bf16.mxu0 %v241
  %648 = vmatmul.mubr.bf16.gmra.mrb[0].mxu0 %v240
  %v649 = vpop.f32.mrb[0].mxu0
  %v650 = vadd.f32 %v553, %v649
  %v651 = vpop.f32.mrb[0].mxu0
  %v652 = vpop.f32.mrb[0].mxu0
  %v653 = vadd.f32 %v556, %v652
  %v654 = vpop.f32.mrb[0].mxu0
  %655 = vmatprep.mubr.bf16.mxu0 %v245
  %656 = vmatmul.mubr.bf16.gmra.mrb[0].mxu0 %v244
  %v657 = vpop.f32.mrb[0].mxu0
  %v658 = vadd.f32 %v561, %v657
  %v659 = vpop.f32.mrb[0].mxu0
  %v660 = vpop.f32.mrb[0].mxu0
  %v661 = vadd.f32 %v564, %v660
  %v662 = vpop.f32.mrb[0].mxu0
  %663 = vdwg.mxu0
  %v664 = vmax.f32 %v602, 0.0
  %v665 = vmax.f32 %v605, 0.0
  %v666 = vmax.f32 %v610, 0.0
  %v667 = vmax.f32 %v613, 0.0
  %v668 = vmax.f32 %v618, 0.0
  %v669 = vmax.f32 %v621, 0.0
  %v670 = vmax.f32 %v626, 0.0
  %v671 = vmax.f32 %v629, 0.0
  %v672 = vmax.f32 %v634, 0.0
  %v673 = vmax.f32 %v637, 0.0
  %v674 = vmax.f32 %v642, 0.0
  %v675 = vmax.f32 %v645, 0.0
  %v676 = vmax.f32 %v650, 0.0
  %v677 = vmax.f32 %v653, 0.0
  %v678 = vmax.f32 %v658, 0.0
  %v679 = vmax.f32 %v661, 0.0
  %680 = vst [vmem:[%s3] sm:$0xff] %v664
  %681 = vst [vmem:[%s3 + $0x8] sm:$0xff] %v665
  %682 = vst [vmem:[%s3 + $0x10] sm:$0xff] %v666
  %683 = vst [vmem:[%s3 + $0x18] sm:$0xff] %v667
  %684 = vst [vmem:[%s3 + $0x20] sm:$0xff] %v668
  %685 = vst [vmem:[%s3 + $0x28] sm:$0xff] %v669
  %686 = vst [vmem:[%s3 + $0x30] sm:$0xff] %v670
  %687 = vst [vmem:[%s3 + $0x38] sm:$0xff] %v671
  %688 = vst [vmem:[%s3 + $0x40] sm:$0xff] %v672
  %689 = vst [vmem:[%s3 + $0x48] sm:$0xff] %v673
  %690 = vst [vmem:[%s3 + $0x50] sm:$0xff] %v674
  %691 = vst [vmem:[%s3 + $0x58] sm:$0xff] %v675
  %692 = vst [vmem:[%s3 + $0x60] sm:$0xff] %v676
  %693 = vst [vmem:[%s3 + $0x68] sm:$0xff] %v677
  %694 = vst [vmem:[%s3 + $0x70] sm:$0xff] %v678
  %695 = vst [vmem:[%s3 + $0x78] sm:$0xff] %v679
  // Predicated region
  $region14: #{forward.5} parent=0 // pred_check
    _
  $region15: #{forward.5} parent=0 // pred_check_branch
    %697 = sbr.rel (0) target = $region17
  $region16: #{forward.5} parent=0 // pred_region
    _
  $region17: #{forward.5} parent=0 // pred_fallthru
    _
  // Predicated region
  $region18: #{forward.5} parent=0 // pred_check
    _
  $region19: #{forward.5} parent=0 // pred_check_branch
    %699 = sbr.rel (0) target = $region21
  $region20: #{forward.5} parent=0 // pred_region
    _
  $region21: #{forward.5} parent=0 // pred_fallthru
    _

// kernel: forward.7
$region0: #{forward.7}
  #allocation0 [shape = 'u32[]', space=smem, size = 0x4, offset = 0x4, fixed_abs, tag = 'smem constant byte address 0x4 - core index']
  #allocation1 [shape = 'u32[144,128]{1,0:T(1,128)}', space=vmem, size = 0x12000, scoped, tag = 'internal scratch']
  %s0 = inlined_call_operand.vmem [shape: bf16[16,512], index: 0, kind: input, shape index: {}]
  %s1 = inlined_call_operand.vmem [shape: bf16[512,128], index: 1, kind: input, shape index: {}]
  %s2 = inlined_call_operand.vmem [shape: f32[1,128], index: 2, kind: input, shape index: {}]
  %s3 = inlined_call_operand.vmem [shape: f32[16,128], index: 3, kind: output, shape index: {}]
  %s4 = sld [smem:[#allocation0]]
  $region22: #{forward.7} parent=0
    _
  %s6 = ssub.s32 1, %s4
  %s7 = scalar_select 0, %s6, %s4
  // Predicated region
  $region2: #{forward.7} parent=0 // pred_check
    _
  $region3: #{forward.7} parent=0 // pred_check_branch
    %9 = sbr.rel (0) target = $region5
  $region4: #{forward.7} parent=0 // pred_region
    _
  $region5: #{forward.7} parent=0 // pred_fallthru
    _
  // Predicated region
  $region6: #{forward.7} parent=0 // pred_check
    _
  $region7: #{forward.7} parent=0 // pred_check_branch
    %11 = sbr.rel (0) target = $region9
  $region8: #{forward.7} parent=0 // pred_region
    _
  $region9: #{forward.7} parent=0 // pred_fallthru
    _
  // Predicated region
  $region10: #{forward.7} parent=0 // pred_check
    _
  $region11: #{forward.7} parent=0 // pred_check_branch
    %13 = sbr.rel (0) target = $region13
  $region12: #{forward.7} parent=0 // pred_region
    _
  $region13: #{forward.7} parent=0 // pred_fallthru
    _
  %v15 = vld [vmem:[%s0] sm:$0xff]
  %v16 = vld [vmem:[%s0 + $0x8] sm:$0xff]
  %v17 = vld [vmem:[%s0 + $0x10] sm:$0xff]
  %v18 = vld [vmem:[%s0 + $0x18] sm:$0xff]
  %v19 = vld [vmem:[%s1] sm:$0xf]
  %v20 = vld [vmem:[%s1 + $0x4] sm:$0xf]
  %v21 = vld [vmem:[%s1 + $0x8] sm:$0xf]
  %v22 = vld [vmem:[%s1 + $0xc] sm:$0xf]
  %v23 = vld [vmem:[%s1 + $0x10] sm:$0xf]
  %v24 = vld [vmem:[%s1 + $0x14] sm:$0xf]
  %v25 = vld [vmem:[%s1 + $0x18] sm:$0xf]
  %v26 = vld [vmem:[%s1 + $0x1c] sm:$0xf]
  %v27 = vld [vmem:[%s1 + $0x20] sm:$0xf]
  %v28 = vld [vmem:[%s1 + $0x24] sm:$0xf]
  %v29 = vld [vmem:[%s1 + $0x28] sm:$0xf]
  %v30 = vld [vmem:[%s1 + $0x2c] sm:$0xf]
  %v31 = vld [vmem:[%s1 + $0x30] sm:$0xf]
  %v32 = vld [vmem:[%s1 + $0x34] sm:$0xf]
  %v33 = vld [vmem:[%s1 + $0x38] sm:$0xf]
  %v34 = vld [vmem:[%s1 + $0x3c] sm:$0xf]
  %v35 = vld [vmem:[%s1 + $0x40] sm:$0xf]
  %v36 = vld [vmem:[%s1 + $0x44] sm:$0xf]
  %v37 = vld [vmem:[%s1 + $0x48] sm:$0xf]
  %v38 = vld [vmem:[%s1 + $0x4c] sm:$0xf]
  %v39 = vld [vmem:[%s1 + $0x50] sm:$0xf]
  %v40 = vld [vmem:[%s1 + $0x54] sm:$0xf]
  %v41 = vld [vmem:[%s1 + $0x58] sm:$0xf]
  %v42 = vld [vmem:[%s1 + $0x5c] sm:$0xf]
  %v43 = vld [vmem:[%s1 + $0x60] sm:$0xf]
  %v44 = vld [vmem:[%s1 + $0x64] sm:$0xf]
  %v45 = vld [vmem:[%s1 + $0x68] sm:$0xf]
  %v46 = vld [vmem:[%s1 + $0x6c] sm:$0xf]
  %v47 = vld [vmem:[%s1 + $0x70] sm:$0xf]
  %v48 = vld [vmem:[%s1 + $0x74] sm:$0xf]
  %v49 = vld [vmem:[%s1 + $0x78] sm:$0xf]
  %v50 = vld [vmem:[%s1 + $0x7c] sm:$0xf]
  %v51 = vld [vmem:[%s1 + $0x80] sm:$0xf]
  %v52 = vld [vmem:[%s1 + $0x84] sm:$0xf]
  %v53 = vld [vmem:[%s1 + $0x88] sm:$0xf]
  %v54 = vld [vmem:[%s1 + $0x8c] sm:$0xf]
  %v55 = vld [vmem:[%s1 + $0x90] sm:$0xf]
  %v56 = vld [vmem:[%s1 + $0x94] sm:$0xf]
  %v57 = vld [vmem:[%s1 + $0x98] sm:$0xf]
  %v58 = vld [vmem:[%s1 + $0x9c] sm:$0xf]
  %v59 = vld [vmem:[%s1 + $0xa0] sm:$0xf]
  %v60 = vld [vmem:[%s1 + $0xa4] sm:$0xf]
  %v61 = vld [vmem:[%s1 + $0xa8] sm:$0xf]
  %v62 = vld [vmem:[%s1 + $0xac] sm:$0xf]
  %v63 = vld [vmem:[%s1 + $0xb0] sm:$0xf]
  %v64 = vld [vmem:[%s1 + $0xb4] sm:$0xf]
  %v65 = vld [vmem:[%s1 + $0xb8] sm:$0xf]
  %v66 = vld [vmem:[%s1 + $0xbc] sm:$0xf]
  %v67 = vld [vmem:[%s1 + $0xc0] sm:$0xf]
  %v68 = vld [vmem:[%s1 + $0xc4] sm:$0xf]
  %v69 = vld [vmem:[%s1 + $0xc8] sm:$0xf]
  %v70 = vld [vmem:[%s1 + $0xcc] sm:$0xf]
  %v71 = vld [vmem:[%s1 + $0xd0] sm:$0xf]
  %v72 = vld [vmem:[%s1 + $0xd4] sm:$0xf]
  %v73 = vld [vmem:[%s1 + $0xd8] sm:$0xf]
  %v74 = vld [vmem:[%s1 + $0xdc] sm:$0xf]
  %v75 = vld [vmem:[%s1 + $0xe0] sm:$0xf]
  %v76 = vld [vmem:[%s1 + $0xe4] sm:$0xf]
  %v77 = vld [vmem:[%s1 + $0xe8] sm:$0xf]
  %v78 = vld [vmem:[%s1 + $0xec] sm:$0xf]
  %v79 = vld [vmem:[%s1 + $0xf0] sm:$0xf]
  %v80 = vld [vmem:[%s1 + $0xf4] sm:$0xf]
  %v81 = vld [vmem:[%s1 + $0xf8] sm:$0xf]
  %v82 = vld [vmem:[%s1 + $0xfc] sm:$0xf]
  %v83 = vld [vmem:[%s2] sm:$0x1]
  %v85 = vlaneseq
  %v86 = vshrl.u32 %v85, 7
  %v87 = vsub.s32 0, %v86
  %v88 = vrot.slane %v83, %v87
  %v94 = vunpack.c.l.b16 %v15
  %v95 = vunpack.c.h.b16 %v15
  %v96 = vunpack.c.l.b16 %v16
  %v97 = vunpack.c.h.b16 %v16
  %v98 = vunpack.c.l.b16 %v17
  %v99 = vunpack.c.h.b16 %v17
  %v100 = vunpack.c.l.b16 %v18
  %v101 = vunpack.c.h.b16 %v18
  %v102 = vpack.c.b16 %v98, %v94
  %v103 = vpack.c.b16 %v99, %v95
  %v104 = vpack.c.b16 %v100, %v96
  %v105 = vpack.c.b16 %v101, %v97
  %v174 = vunpack.c.l.b16 %v19
  %v175 = vunpack.c.l.b16 %v20
  %v176 = vunpack.c.l.b16 %v21
  %v177 = vunpack.c.l.b16 %v22
  %v178 = vunpack.c.l.b16 %v23
  %v179 = vunpack.c.l.b16 %v24
  %v180 = vunpack.c.l.b16 %v25
  %v181 = vunpack.c.l.b16 %v26
  %v182 = vunpack.c.l.b16 %v27
  %v183 = vunpack.c.l.b16 %v28
  %v184 = vunpack.c.l.b16 %v29
  %v185 = vunpack.c.l.b16 %v30
  %v186 = vunpack.c.l.b16 %v31
  %v187 = vunpack.c.l.b16 %v32
  %v188 = vunpack.c.l.b16 %v33
  %v189 = vunpack.c.l.b16 %v34
  %v190 = vunpack.c.l.b16 %v35
  %v191 = vunpack.c.l.b16 %v36
  %v192 = vunpack.c.l.b16 %v37
  %v193 = vunpack.c.l.b16 %v38
  %v194 = vunpack.c.l.b16 %v39
  %v195 = vunpack.c.l.b16 %v40
  %v196 = vunpack.c.l.b16 %v41
  %v197 = vunpack.c.l.b16 %v42
  %v198 = vunpack.c.l.b16 %v43
  %v199 = vunpack.c.l.b16 %v44
  %v200 = vunpack.c.l.b16 %v45
  %v201 = vunpack.c.l.b16 %v46
  %v202 = vunpack.c.l.b16 %v47
  %v203 = vunpack.c.l.b16 %v48
  %v204 = vunpack.c.l.b16 %v49
  %v205 = vunpack.c.l.b16 %v50
  %v206 = vunpack.c.l.b16 %v51
  %v207 = vunpack.c.l.b16 %v52
  %v208 = vunpack.c.l.b16 %v53
  %v209 = vunpack.c.l.b16 %v54
  %v210 = vunpack.c.l.b16 %v55
  %v211 = vunpack.c.l.b16 %v56
  %v212 = vunpack.c.l.b16 %v57
  %v213 = vunpack.c.l.b16 %v58
  %v214 = vunpack.c.l.b16 %v59
  %v215 = vunpack.c.l.b16 %v60
  %v216 = vunpack.c.l.b16 %v61
  %v217 = vunpack.c.l.b16 %v62
  %v218 = vunpack.c.l.b16 %v63
  %v219 = vunpack.c.l.b16 %v64
  %v220 = vunpack.c.l.b16 %v65
  %v221 = vunpack.c.l.b16 %v66
  %v222 = vunpack.c.l.b16 %v67
  %v223 = vunpack.c.l.b16 %v68
  %v224 = vunpack.c.l.b16 %v69
  %v225 = vunpack.c.l.b16 %v70
  %v226 = vunpack.c.l.b16 %v71
  %v227 = vunpack.c.l.b16 %v72
  %v228 = vunpack.c.l.b16 %v73
  %v229 = vunpack.c.l.b16 %v74
  %v230 = vunpack.c.l.b16 %v75
  %v231 = vunpack.c.l.b16 %v76
  %v232 = vunpack.c.l.b16 %v77
  %v233 = vunpack.c.l.b16 %v78
  %v234 = vunpack.c.l.b16 %v79
  %v235 = vunpack.c.l.b16 %v80
  %v236 = vunpack.c.l.b16 %v81
  %v237 = vunpack.c.l.b16 %v82
  %v238 = vpack.c.b16 %v175, %v174
  %v239 = vpack.c.b16 %v177, %v176
  %v240 = vpack.c.b16 %v179, %v178
  %v241 = vpack.c.b16 %v181, %v180
  %v242 = vpack.c.b16 %v183, %v182
  %v243 = vpack.c.b16 %v185, %v184
  %v244 = vpack.c.b16 %v187, %v186
  %v245 = vpack.c.b16 %v189, %v188
  %v246 = vpack.c.b16 %v191, %v190
  %v247 = vpack.c.b16 %v193, %v192
  %v248 = vpack.c.b16 %v195, %v194
  %v249 = vpack.c.b16 %v197, %v196
  %v250 = vpack.c.b16 %v199, %v198
  %v251 = vpack.c.b16 %v201, %v200
  %v252 = vpack.c.b16 %v203, %v202
  %v253 = vpack.c.b16 %v205, %v204
  %v254 = vpack.c.b16 %v207, %v206
  %v255 = vpack.c.b16 %v209, %v208
  %v256 = vpack.c.b16 %v211, %v210
  %v257 = vpack.c.b16 %v213, %v212
  %v258 = vpack.c.b16 %v215, %v214
  %v259 = vpack.c.b16 %v217, %v216
  %v260 = vpack.c.b16 %v219, %v218
  %v261 = vpack.c.b16 %v221, %v220
  %v262 = vpack.c.b16 %v223, %v222
  %v263 = vpack.c.b16 %v225, %v224
  %v264 = vpack.c.b16 %v227, %v226
  %v265 = vpack.c.b16 %v229, %v228
  %v266 = vpack.c.b16 %v231, %v230
  %v267 = vpack.c.b16 %v233, %v232
  %v268 = vpack.c.b16 %v235, %v234
  %v269 = vpack.c.b16 %v237, %v236
  %302 = vmatprep.subr.bf16.mxu0 0
  %303 = vmatpush1.bf16.msra.mxu0 %v238
  %304 = vmatprep.subr.bf16.mxu0 0
  %305 = vmatpush1.bf16.msra.mxu0 %v239
  %306 = vmatprep.subr.bf16.mxu0 0
  %307 = vmatpush1.bf16.msra.mxu0 %v240
  %308 = vmatprep.subr.bf16.mxu0 0
  %309 = vmatpush1.bf16.msra.mxu0 %v241
  %310 = vmatprep.subr.bf16.mxu0 0
  %311 = vmatpush1.bf16.msra.mxu0 %v242
  %312 = vmatprep.subr.bf16.mxu0 0
  %313 = vmatpush1.bf16.msra.mxu0 %v243
  %314 = vmatprep.subr.bf16.mxu0 0
  %315 = vmatpush1.bf16.msra.mxu0 %v244
  %316 = vmatprep.subr.bf16.mxu0 0
  %317 = vmatpush1.bf16.msra.mxu0 %v245
  %318 = vmatprep.subr.bf16.mxu0 0
  %319 = vmatpush1.bf16.msra.mxu0 %v246
  %320 = vmatprep.subr.bf16.mxu0 0
  %321 = vmatpush1.bf16.msra.mxu0 %v247
  %322 = vmatprep.subr.bf16.mxu0 0
  %323 = vmatpush1.bf16.msra.mxu0 %v248
  %324 = vmatprep.subr.bf16.mxu0 0
  %325 = vmatpush1.bf16.msra.mxu0 %v249
  %326 = vmatprep.subr.bf16.mxu0 0
  %327 = vmatpush1.bf16.msra.mxu0 %v250
  %328 = vmatprep.subr.bf16.mxu0 0
  %329 = vmatpush1.bf16.msra.mxu0 %v251
  %330 = vmatprep.subr.bf16.mxu0 0
  %331 = vmatpush1.bf16.msra.mxu0 %v252
  %332 = vmatprep.subr.bf16.mxu0 0
  %333 = vmatpush1.bf16.msra.mxu0 %v253
  %334 = vmatprep.mubr.bf16.mxu0 %v103
  %335 = vmatmul.mubr.bf16.gmra.mrb[0].mxu0 %v102
  %v336 = vpop.f32.mrb[0].mxu0
  %v337 = vadd.f32 %v88, %v336
  %v338 = vpop.f32.mrb[0].mxu0
  %v339 = vpop.f32.mrb[0].mxu0
  %v340 = vadd.f32 %v88, %v339
  %v341 = vpop.f32.mrb[0].mxu0
  %342 = vdwg.mxu0
  %343 = vmatprep.subr.bf16.mxu0 0
  %344 = vmatpush1.bf16.msra.mxu0 %v254
  %345 = vmatprep.subr.bf16.mxu0 0
  %346 = vmatpush1.bf16.msra.mxu0 %v255
  %347 = vmatprep.subr.bf16.mxu0 0
  %348 = vmatpush1.bf16.msra.mxu0 %v256
  %349 = vmatprep.subr.bf16.mxu0 0
  %350 = vmatpush1.bf16.msra.mxu0 %v257
  %351 = vmatprep.subr.bf16.mxu0 0
  %352 = vmatpush1.bf16.msra.mxu0 %v258
  %353 = vmatprep.subr.bf16.mxu0 0
  %354 = vmatpush1.bf16.msra.mxu0 %v259
  %355 = vmatprep.subr.bf16.mxu0 0
  %356 = vmatpush1.bf16.msra.mxu0 %v260
  %357 = vmatprep.subr.bf16.mxu0 0
  %358 = vmatpush1.bf16.msra.mxu0 %v261
  %359 = vmatprep.subr.bf16.mxu0 0
  %360 = vmatpush1.bf16.msra.mxu0 %v262
  %361 = vmatprep.subr.bf16.mxu0 0
  %362 = vmatpush1.bf16.msra.mxu0 %v263
  %363 = vmatprep.subr.bf16.mxu0 0
  %364 = vmatpush1.bf16.msra.mxu0 %v264
  %365 = vmatprep.subr.bf16.mxu0 0
  %366 = vmatpush1.bf16.msra.mxu0 %v265
  %367 = vmatprep.subr.bf16.mxu0 0
  %368 = vmatpush1.bf16.msra.mxu0 %v266
  %369 = vmatprep.subr.bf16.mxu0 0
  %370 = vmatpush1.bf16.msra.mxu0 %v267
  %371 = vmatprep.subr.bf16.mxu0 0
  %372 = vmatpush1.bf16.msra.mxu0 %v268
  %373 = vmatprep.subr.bf16.mxu0 0
  %374 = vmatpush1.bf16.msra.mxu0 %v269
  %375 = vmatprep.mubr.bf16.mxu0 %v105
  %376 = vmatmul.mubr.bf16.gmra.mrb[0].mxu0 %v104
  %v377 = vpop.f32.mrb[0].mxu0
  %v378 = vadd.f32 %v337, %v377
  %v379 = vpop.f32.mrb[0].mxu0
  %v380 = vpop.f32.mrb[0].mxu0
  %v381 = vadd.f32 %v340, %v380
  %v382 = vpop.f32.mrb[0].mxu0
  %383 = vdwg.mxu0
  %v384 = vlaneseq
  %v385 = vand.u32 %v384, 127
  %vm386 = vcmp.lt.s32.totalorder %v385, 10
  %v387 = vsel %vm386, %v378, -1e+30
  %v388 = vsel %vm386, %v381, -1e+30
  %389 = vmax.xlane.f32.xlu0 %v387
  %v390 = vpop.xlane.xlu0 %389
  %391 = vmax.xlane.f32.xlu0 %v388
  %v392 = vpop.xlane.xlu0 %391
  %v393 = vsub.f32 %v387, %v390
  %v394 = vsub.f32 %v388, %v392
  %v395 = vmul.f32 %v393, 1.442695
  %v396 = vpow.pop %v395
  %v397 = vmul.f32 %v394, 1.442695
  %v398 = vpow.pop %v397
  %v399 = vsel %vm386, %v396, 0.0
  %v400 = vsel %vm386, %v398, 0.0
  %401 = vadd.xlane.f32.xlu0 %v399
  %v402 = vpop.xlane.xlu0 %401
  %403 = vadd.xlane.f32.xlu0 %v400
  %v404 = vpop.xlane.xlu0 %403
  %v405 = vlog2.pop %v402
  %v406 = vmul.f32 %v405, 0.6931472
  %v407 = vlog2.pop %v404
  %v408 = vmul.f32 %v407, 0.6931472
  %v409 = vsub.f32 %v393, %v406
  %v410 = vsub.f32 %v394, %v408
  %411 = vst [vmem:[%s3] sm:$0xff] %v409
  %412 = vst [vmem:[%s3 + $0x8] sm:$0xff] %v410
  // Predicated region
  $region14: #{forward.7} parent=0 // pred_check
    _
  $region15: #{forward.7} parent=0 // pred_check_branch
    %414 = sbr.rel (0) target = $region17
  $region16: #{forward.7} parent=0 // pred_region
    _
  $region17: #{forward.7} parent=0 // pred_fallthru
    _
  // Predicated region
  $region18: #{forward.7} parent=0 // pred_check
    _
  $region19: #{forward.7} parent=0 // pred_check_branch
    %416 = sbr.rel (0) target = $region21
  $region20: #{forward.7} parent=0 // pred_region
    _
  $region21: #{forward.7} parent=0 // pred_fallthru
    _

// kernel: forward.6
$region0: #{forward.6}
  #allocation0 [shape = 'u32[]', space=smem, size = 0x4, offset = 0x4, fixed_abs, tag = 'smem constant byte address 0x4 - core index']
  #allocation1 [shape = 'u32[144,128]{1,0:T(1,128)}', space=vmem, size = 0x12000, scoped, tag = 'internal scratch']
  %s0 = inlined_call_operand.vmem [shape: bf16[16,800], index: 0, kind: input, shape index: {}]
  %s1 = inlined_call_operand.vmem [shape: bf16[800,512], index: 1, kind: input, shape index: {}]
  %s2 = inlined_call_operand.vmem [shape: f32[1,512], index: 2, kind: input, shape index: {}]
  %s3 = inlined_call_operand.vmem [shape: f32[16,512], index: 3, kind: output, shape index: {}]
  %s4 = sld [smem:[#allocation0]]
  $region22: #{forward.6} parent=0
    _
  %s6 = ssub.s32 1, %s4
  %s7 = scalar_select 0, %s6, %s4
  // Predicated region
  $region2: #{forward.6} parent=0 // pred_check
    _
  $region3: #{forward.6} parent=0 // pred_check_branch
    %9 = sbr.rel (0) target = $region5
  $region4: #{forward.6} parent=0 // pred_region
    _
  $region5: #{forward.6} parent=0 // pred_fallthru
    _
  // Predicated region
  $region6: #{forward.6} parent=0 // pred_check
    _
  $region7: #{forward.6} parent=0 // pred_check_branch
    %11 = sbr.rel (0) target = $region9
  $region8: #{forward.6} parent=0 // pred_region
    _
  $region9: #{forward.6} parent=0 // pred_fallthru
    _
  // Predicated region
  $region10: #{forward.6} parent=0 // pred_check
    _
  $region11: #{forward.6} parent=0 // pred_check_branch
    %13 = sbr.rel (0) target = $region13
  $region12: #{forward.6} parent=0 // pred_region
    _
  $region13: #{forward.6} parent=0 // pred_fallthru
    _
  %v15 = vld [vmem:[%s0] sm:$0xff]
  %v16 = vld [vmem:[%s0 + $0x8] sm:$0xff]
  %v17 = vld [vmem:[%s0 + $0x10] sm:$0xff]
  %v18 = vld [vmem:[%s0 + $0x18] sm:$0xf]
  %v19 = vld [vmem:[%s0 + $0x1c] sm:$0xff]
  %v20 = vld [vmem:[%s0 + $0x24] sm:$0xff]
  %v21 = vld [vmem:[%s0 + $0x2c] sm:$0xff]
  %v22 = vld [vmem:[%s0 + $0x34] sm:$0xf]
  %v23 = vld [vmem:[%s1] sm:$0xff]
  %v24 = vld [vmem:[%s1 + $0x8] sm:$0xff]
  %v25 = vld [vmem:[%s1 + $0x10] sm:$0xff]
  %v26 = vld [vmem:[%s1 + $0x18] sm:$0xff]
  %v27 = vld [vmem:[%s1 + $0x20] sm:$0xff]
  %v28 = vld [vmem:[%s1 + $0x28] sm:$0xff]
  %v29 = vld [vmem:[%s1 + $0x30] sm:$0xff]
  %v30 = vld [vmem:[%s1 + $0x38] sm:$0xff]
  %v31 = vld [vmem:[%s1 + $0x40] sm:$0xff]
  %v32 = vld [vmem:[%s1 + $0x48] sm:$0xff]
  %v33 = vld [vmem:[%s1 + $0x50] sm:$0xff]
  %v34 = vld [vmem:[%s1 + $0x58] sm:$0xff]
  %v35 = vld [vmem:[%s1 + $0x60] sm:$0xff]
  %v36 = vld [vmem:[%s1 + $0x68] sm:$0xff]
  %v37 = vld [vmem:[%s1 + $0x70] sm:$0xff]
  %v38 = vld [vmem:[%s1 + $0x78] sm:$0xff]
  %v39 = vld [vmem:[%s1 + $0x80] sm:$0xff]
  %v40 = vld [vmem:[%s1 + $0x88] sm:$0xff]
  %v41 = vld [vmem:[%s1 + $0x90] sm:$0xff]
  %v42 = vld [vmem:[%s1 + $0x98] sm:$0xff]
  %v43 = vld [vmem:[%s1 + $0xa0] sm:$0xff]
  %v44 = vld [vmem:[%s1 + $0xa8] sm:$0xff]
  %v45 = vld [vmem:[%s1 + $0xb0] sm:$0xff]
  %v46 = vld [vmem:[%s1 + $0xb8] sm:$0xff]
  %v47 = vld [vmem:[%s1 + $0xc0] sm:$0xff]
  %v48 = vld [vmem:[%s1 + $0xc8] sm:$0xff]
  %v49 = vld [vmem:[%s1 + $0xd0] sm:$0xff]
  %v50 = vld [vmem:[%s1 + $0xd8] sm:$0xff]
  %v51 = vld [vmem:[%s1 + $0xe0] sm:$0xff]
  %v52 = vld [vmem:[%s1 + $0xe8] sm:$0xff]
  %v53 = vld [vmem:[%s1 + $0xf0] sm:$0xff]
  %v54 = vld [vmem:[%s1 + $0xf8] sm:$0xff]
  %v55 = vld [vmem:[%s1 + $0x100] sm:$0xff]
  %v56 = vld [vmem:[%s1 + $0x108] sm:$0xff]
  %v57 = vld [vmem:[%s1 + $0x110] sm:$0xff]
  %v58 = vld [vmem:[%s1 + $0x118] sm:$0xff]
  %v59 = vld [vmem:[%s1 + $0x120] sm:$0xff]
  %v60 = vld [vmem:[%s1 + $0x128] sm:$0xff]
  %v61 = vld [vmem:[%s1 + $0x130] sm:$0xff]
  %v62 = vld [vmem:[%s1 + $0x138] sm:$0xff]
  %v63 = vld [vmem:[%s1 + $0x140] sm:$0xff]
  %v64 = vld [vmem:[%s1 + $0x148] sm:$0xff]
  %v65 = vld [vmem:[%s1 + $0x150] sm:$0xff]
  %v66 = vld [vmem:[%s1 + $0x158] sm:$0xff]
  %v67 = vld [vmem:[%s1 + $0x160] sm:$0xff]
  %v68 = vld [vmem:[%s1 + $0x168] sm:$0xff]
  %v69 = vld [vmem:[%s1 + $0x170] sm:$0xff]
  %v70 = vld [vmem:[%s1 + $0x178] sm:$0xff]
  %v71 = vld [vmem:[%s1 + $0x180] sm:$0xff]
  %v72 = vld [vmem:[%s1 + $0x188] sm:$0xff]
  %v73 = vld [vmem:[%s1 + $0x190] sm:$0xff]
  %v74 = vld [vmem:[%s1 + $0x198] sm:$0xff]
  %v75 = vld [vmem:[%s1 + $0x1a0] sm:$0xff]
  %v76 = vld [vmem:[%s1 + $0x1a8] sm:$0xff]
  %v77 = vld [vmem:[%s1 + $0x1b0] sm:$0xff]
  %v78 = vld [vmem:[%s1 + $0x1b8] sm:$0xff]
  %v79 = vld [vmem:[%s1 + $0x1c0] sm:$0xff]
  %v80 = vld [vmem:[%s1 + $0x1c8] sm:$0xff]
  %v81 = vld [vmem:[%s1 + $0x1d0] sm:$0xff]
  %v82 = vld [vmem:[%s1 + $0x1d8] sm:$0xff]
  %v83 = vld [vmem:[%s1 + $0x1e0] sm:$0xff]
  %v84 = vld [vmem:[%s1 + $0x1e8] sm:$0xff]
  %v85 = vld [vmem:[%s1 + $0x1f0] sm:$0xff]
  %v86 = vld [vmem:[%s1 + $0x1f8] sm:$0xff]
  %v87 = vld [vmem:[%s1 + $0x200] sm:$0xff]
  %v88 = vld [vmem:[%s1 + $0x208] sm:$0xff]
  %v89 = vld [vmem:[%s1 + $0x210] sm:$0xff]
  %v90 = vld [vmem:[%s1 + $0x218] sm:$0xff]
  %v91 = vld [vmem:[%s1 + $0x220] sm:$0xff]
  %v92 = vld [vmem:[%s1 + $0x228] sm:$0xff]
  %v93 = vld [vmem:[%s1 + $0x230] sm:$0xff]
  %v94 = vld [vmem:[%s1 + $0x238] sm:$0xff]
  %v95 = vld [vmem:[%s1 + $0x240] sm:$0xff]
  %v96 = vld [vmem:[%s1 + $0x248] sm:$0xff]
  %v97 = vld [vmem:[%s1 + $0x250] sm:$0xff]
  %v98 = vld [vmem:[%s1 + $0x258] sm:$0xff]
  %v99 = vld [vmem:[%s1 + $0x260] sm:$0xff]
  %v100 = vld [vmem:[%s1 + $0x268] sm:$0xff]
  %v101 = vld [vmem:[%s1 + $0x270] sm:$0xff]
  %v102 = vld [vmem:[%s1 + $0x278] sm:$0xff]
  %v103 = vld [vmem:[%s1 + $0x280] sm:$0xff]
  %v104 = vld [vmem:[%s1 + $0x288] sm:$0xff]
  %v105 = vld [vmem:[%s1 + $0x290] sm:$0xff]
  %v106 = vld [vmem:[%s1 + $0x298] sm:$0xff]
  %v107 = vld [vmem:[%s1 + $0x2a0] sm:$0xff]
  %v108 = vld [vmem:[%s1 + $0x2a8] sm:$0xff]
  %v109 = vld [vmem:[%s1 + $0x2b0] sm:$0xff]
  %v110 = vld [vmem:[%s1 + $0x2b8] sm:$0xff]
  %v111 = vld [vmem:[%s1 + $0x2c0] sm:$0xff]
  %v112 = vld [vmem:[%s1 + $0x2c8] sm:$0xff]
  %v113 = vld [vmem:[%s1 + $0x2d0] sm:$0xff]
  %v114 = vld [vmem:[%s1 + $0x2d8] sm:$0xff]
  %v115 = vld [vmem:[%s1 + $0x2e0] sm:$0xff]
  %v116 = vld [vmem:[%s1 + $0x2e8] sm:$0xff]
  %v117 = vld [vmem:[%s1 + $0x2f0] sm:$0xff]
  %v118 = vld [vmem:[%s1 + $0x2f8] sm:$0xff]
  %v119 = vld [vmem:[%s1 + $0x300] sm:$0xff]
  %v120 = vld [vmem:[%s1 + $0x308] sm:$0xff]
  %v121 = vld [vmem:[%s1 + $0x310] sm:$0xff]
  %v122 = vld [vmem:[%s1 + $0x318] sm:$0xff]
  %v123 = vld [vmem:[%s1 + $0x320] sm:$0xff]
  %v124 = vld [vmem:[%s1 + $0x328] sm:$0xff]
  %v125 = vld [vmem:[%s1 + $0x330] sm:$0xff]
  %v126 = vld [vmem:[%s1 + $0x338] sm:$0xff]
  %v127 = vld [vmem:[%s1 + $0x340] sm:$0xff]
  %v128 = vld [vmem:[%s1 + $0x348] sm:$0xff]
  %v129 = vld [vmem:[%s1 + $0x350] sm:$0xff]
  %v130 = vld [vmem:[%s1 + $0x358] sm:$0xff]
  %v131 = vld [vmem:[%s1 + $0x360] sm:$0xff]
  %v132 = vld [vmem:[%s1 + $0x368] sm:$0xff]
  %v133 = vld [vmem:[%s1 + $0x370] sm:$0xff]
  %v134 = vld [vmem:[%s1 + $0x378] sm:$0xff]
  %v135 = vld [vmem:[%s1 + $0x380] sm:$0xff]
  %v136 = vld [vmem:[%s1 + $0x388] sm:$0xff]
  %v137 = vld [vmem:[%s1 + $0x390] sm:$0xff]
  %v138 = vld [vmem:[%s1 + $0x398] sm:$0xff]
  %v139 = vld [vmem:[%s1 + $0x3a0] sm:$0xff]
  %v140 = vld [vmem:[%s1 + $0x3a8] sm:$0xff]
  %v141 = vld [vmem:[%s1 + $0x3b0] sm:$0xff]
  %v142 = vld [vmem:[%s1 + $0x3b8] sm:$0xff]
  %v143 = vld [vmem:[%s1 + $0x3c0] sm:$0xff]
  %v144 = vld [vmem:[%s1 + $0x3c8] sm:$0xff]
  %v145 = vld [vmem:[%s1 + $0x3d0] sm:$0xff]
  %v146 = vld [vmem:[%s1 + $0x3d8] sm:$0xff]
  %v147 = vld [vmem:[%s1 + $0x3e0] sm:$0xff]
  %v148 = vld [vmem:[%s1 + $0x3e8] sm:$0xff]
  %v149 = vld [vmem:[%s1 + $0x3f0] sm:$0xff]
  %v150 = vld [vmem:[%s1 + $0x3f8] sm:$0xff]
  %v151 = vld [vmem:[%s1 + $0x400] sm:$0xff]
  %v152 = vld [vmem:[%s1 + $0x408] sm:$0xff]
  %v153 = vld [vmem:[%s1 + $0x410] sm:$0xff]
  %v154 = vld [vmem:[%s1 + $0x418] sm:$0xff]
  %v155 = vld [vmem:[%s1 + $0x420] sm:$0xff]
  %v156 = vld [vmem:[%s1 + $0x428] sm:$0xff]
  %v157 = vld [vmem:[%s1 + $0x430] sm:$0xff]
  %v158 = vld [vmem:[%s1 + $0x438] sm:$0xff]
  %v159 = vld [vmem:[%s1 + $0x440] sm:$0xff]
  %v160 = vld [vmem:[%s1 + $0x448] sm:$0xff]
  %v161 = vld [vmem:[%s1 + $0x450] sm:$0xff]
  %v162 = vld [vmem:[%s1 + $0x458] sm:$0xff]
  %v163 = vld [vmem:[%s1 + $0x460] sm:$0xff]
  %v164 = vld [vmem:[%s1 + $0x468] sm:$0xff]
  %v165 = vld [vmem:[%s1 + $0x470] sm:$0xff]
  %v166 = vld [vmem:[%s1 + $0x478] sm:$0xff]
  %v167 = vld [vmem:[%s1 + $0x480] sm:$0xff]
  %v168 = vld [vmem:[%s1 + $0x488] sm:$0xff]
  %v169 = vld [vmem:[%s1 + $0x490] sm:$0xff]
  %v170 = vld [vmem:[%s1 + $0x498] sm:$0xff]
  %v171 = vld [vmem:[%s1 + $0x4a0] sm:$0xff]
  %v172 = vld [vmem:[%s1 + $0x4a8] sm:$0xff]
  %v173 = vld [vmem:[%s1 + $0x4b0] sm:$0xff]
  %v174 = vld [vmem:[%s1 + $0x4b8] sm:$0xff]
  %v175 = vld [vmem:[%s1 + $0x4c0] sm:$0xff]
  %v176 = vld [vmem:[%s1 + $0x4c8] sm:$0xff]
  %v177 = vld [vmem:[%s1 + $0x4d0] sm:$0xff]
  %v178 = vld [vmem:[%s1 + $0x4d8] sm:$0xff]
  %v179 = vld [vmem:[%s1 + $0x4e0] sm:$0xff]
  %v180 = vld [vmem:[%s1 + $0x4e8] sm:$0xff]
  %v181 = vld [vmem:[%s1 + $0x4f0] sm:$0xff]
  %v182 = vld [vmem:[%s1 + $0x4f8] sm:$0xff]
  %v183 = vld [vmem:[%s1 + $0x500] sm:$0xff]
  %v184 = vld [vmem:[%s1 + $0x508] sm:$0xff]
  %v185 = vld [vmem:[%s1 + $0x510] sm:$0xff]
  %v186 = vld [vmem:[%s1 + $0x518] sm:$0xff]
  %v187 = vld [vmem:[%s1 + $0x520] sm:$0xff]
  %v188 = vld [vmem:[%s1 + $0x528] sm:$0xff]
  %v189 = vld [vmem:[%s1 + $0x530] sm:$0xff]
  %v190 = vld [vmem:[%s1 + $0x538] sm:$0xff]
  %v191 = vld [vmem:[%s1 + $0x540] sm:$0xff]
  %v192 = vld [vmem:[%s1 + $0x548] sm:$0xff]
  %v193 = vld [vmem:[%s1 + $0x550] sm:$0xff]
  %v194 = vld [vmem:[%s1 + $0x558] sm:$0xff]
  %v195 = vld [vmem:[%s1 + $0x560] sm:$0xff]
  %v196 = vld [vmem:[%s1 + $0x568] sm:$0xff]
  %v197 = vld [vmem:[%s1 + $0x570] sm:$0xff]
  %v198 = vld [vmem:[%s1 + $0x578] sm:$0xff]
  %v199 = vld [vmem:[%s1 + $0x580] sm:$0xff]
  %v200 = vld [vmem:[%s1 + $0x588] sm:$0xff]
  %v201 = vld [vmem:[%s1 + $0x590] sm:$0xff]
  %v202 = vld [vmem:[%s1 + $0x598] sm:$0xff]
  %v203 = vld [vmem:[%s1 + $0x5a0] sm:$0xff]
  %v204 = vld [vmem:[%s1 + $0x5a8] sm:$0xff]
  %v205 = vld [vmem:[%s1 + $0x5b0] sm:$0xff]
  %v206 = vld [vmem:[%s1 + $0x5b8] sm:$0xff]
  %v207 = vld [vmem:[%s1 + $0x5c0] sm:$0xff]
  %v208 = vld [vmem:[%s1 + $0x5c8] sm:$0xff]
  %v209 = vld [vmem:[%s1 + $0x5d0] sm:$0xff]
  %v210 = vld [vmem:[%s1 + $0x5d8] sm:$0xff]
  %v211 = vld [vmem:[%s1 + $0x5e0] sm:$0xff]
  %v212 = vld [vmem:[%s1 + $0x5e8] sm:$0xff]
  %v213 = vld [vmem:[%s1 + $0x5f0] sm:$0xff]
  %v214 = vld [vmem:[%s1 + $0x5f8] sm:$0xff]
  %v215 = vld [vmem:[%s1 + $0x600] sm:$0xff]
  %v216 = vld [vmem:[%s1 + $0x608] sm:$0xff]
  %v217 = vld [vmem:[%s1 + $0x610] sm:$0xff]
  %v218 = vld [vmem:[%s1 + $0x618] sm:$0xff]
  %v219 = vld [vmem:[%s1 + $0x620] sm:$0xff]
  %v220 = vld [vmem:[%s1 + $0x628] sm:$0xff]
  %v221 = vld [vmem:[%s1 + $0x630] sm:$0xff]
  %v222 = vld [vmem:[%s1 + $0x638] sm:$0xff]
  %v223 = vld [vmem:[%s2] sm:$0xf]
  %v225 = vlaneseq
  %v226 = vshrl.u32 %v225, 7
  %v227 = vsub.s32 0, %v226
  %v228 = vrot.slane %v223, %v227
  %v229 = vlaneseq
  %v230 = vshrl.u32 %v229, 7
  %v231 = vsub.s32 1, %v230
  %v232 = vrot.slane %v223, %v231
  %v233 = vlaneseq
  %v234 = vshrl.u32 %v233, 7
  %v235 = vsub.s32 2, %v234
  %v236 = vrot.slane %v223, %v235
  %v237 = vlaneseq
  %v238 = vshrl.u32 %v237, 7
  %v239 = vsub.s32 3, %v238
  %v240 = vrot.slane %v223, %v239
  %v253 = vunpack.c.l.b16 %v15
  %v254 = vunpack.c.h.b16 %v15
  %v255 = vunpack.c.l.b16 %v16
  %v256 = vunpack.c.h.b16 %v16
  %v257 = vunpack.c.l.b16 %v17
  %v258 = vunpack.c.h.b16 %v17
  %v259 = vunpack.c.l.b16 %v18
  %v260 = vunpack.c.l.b16 %v19
  %v261 = vunpack.c.h.b16 %v19
  %v262 = vunpack.c.l.b16 %v20
  %v263 = vunpack.c.h.b16 %v20
  %v264 = vunpack.c.l.b16 %v21
  %v265 = vunpack.c.h.b16 %v21
  %v266 = vunpack.c.l.b16 %v22
  %v267 = vpack.c.b16 %v260, %v253
  %v268 = vpack.c.b16 %v261, %v254
  %v269 = vpack.c.b16 %v262, %v255
  %v270 = vpack.c.b16 %v263, %v256
  %v271 = vpack.c.b16 %v264, %v257
  %v272 = vpack.c.b16 %v265, %v258
  %v273 = vpack.c.b16 %v266, %v259
  %v480 = vunpack.c.l.b16 %v23
  %v481 = vunpack.c.h.b16 %v23
  %v482 = vunpack.c.l.b16 %v24
  %v483 = vunpack.c.h.b16 %v24
  %v484 = vunpack.c.l.b16 %v25
  %v485 = vunpack.c.h.b16 %v25
  %v486 = vunpack.c.l.b16 %v26
  %v487 = vunpack.c.h.b16 %v26
  %v488 = vunpack.c.l.b16 %v27
  %v489 = vunpack.c.h.b16 %v27
  %v490 = vunpack.c.l.b16 %v28
  %v491 = vunpack.c.h.b16 %v28
  %v492 = vunpack.c.l.b16 %v29
  %v493 = vunpack.c.h.b16 %v29
  %v494 = vunpack.c.l.b16 %v30
  %v495 = vunpack.c.h.b16 %v30
  %v496 = vunpack.c.l.b16 %v31
  %v497 = vunpack.c.h.b16 %v31
  %v498 = vunpack.c.l.b16 %v32
  %v499 = vunpack.c.h.b16 %v32
  %v500 = vunpack.c.l.b16 %v33
  %v501 = vunpack.c.h.b16 %v33
  %v502 = vunpack.c.l.b16 %v34
  %v503 = vunpack.c.h.b16 %v34
  %v504 = vunpack.c.l.b16 %v35
  %v505 = vunpack.c.h.b16 %v35
  %v506 = vunpack.c.l.b16 %v36
  %v507 = vunpack.c.h.b16 %v36
  %v508 = vunpack.c.l.b16 %v37
  %v509 = vunpack.c.h.b16 %v37
  %v510 = vunpack.c.l.b16 %v38
  %v511 = vunpack.c.h.b16 %v38
  %v512 = vunpack.c.l.b16 %v39
  %v513 = vunpack.c.h.b16 %v39
  %v514 = vunpack.c.l.b16 %v40
  %v515 = vunpack.c.h.b16 %v40
  %v516 = vunpack.c.l.b16 %v41
  %v517 = vunpack.c.h.b16 %v41
  %v518 = vunpack.c.l.b16 %v42
  %v519 = vunpack.c.h.b16 %v42
  %v520 = vunpack.c.l.b16 %v43
  %v521 = vunpack.c.h.b16 %v43
  %v522 = vunpack.c.l.b16 %v44
  %v523 = vunpack.c.h.b16 %v44
  %v524 = vunpack.c.l.b16 %v45
  %v525 = vunpack.c.h.b16 %v45
  %v526 = vunpack.c.l.b16 %v46
  %v527 = vunpack.c.h.b16 %v46
  %v528 = vunpack.c.l.b16 %v47
  %v529 = vunpack.c.h.b16 %v47
  %v530 = vunpack.c.l.b16 %v48
  %v531 = vunpack.c.h.b16 %v48
  %v532 = vunpack.c.l.b16 %v49
  %v533 = vunpack.c.h.b16 %v49
  %v534 = vunpack.c.l.b16 %v50
  %v535 = vunpack.c.h.b16 %v50
  %v536 = vunpack.c.l.b16 %v51
  %v537 = vunpack.c.h.b16 %v51
  %v538 = vunpack.c.l.b16 %v52
  %v539 = vunpack.c.h.b16 %v52
  %v540 = vunpack.c.l.b16 %v53
  %v541 = vunpack.c.h.b16 %v53
  %v542 = vunpack.c.l.b16 %v54
  %v543 = vunpack.c.h.b16 %v54
  %v544 = vunpack.c.l.b16 %v55
  %v545 = vunpack.c.h.b16 %v55
  %v546 = vunpack.c.l.b16 %v56
  %v547 = vunpack.c.h.b16 %v56
  %v548 = vunpack.c.l.b16 %v57
  %v549 = vunpack.c.h.b16 %v57
  %v550 = vunpack.c.l.b16 %v58
  %v551 = vunpack.c.h.b16 %v58
  %v552 = vunpack.c.l.b16 %v59
  %v553 = vunpack.c.h.b16 %v59
  %v554 = vunpack.c.l.b16 %v60
  %v555 = vunpack.c.h.b16 %v60
  %v556 = vunpack.c.l.b16 %v61
  %v557 = vunpack.c.h.b16 %v61
  %v558 = vunpack.c.l.b16 %v62
  %v559 = vunpack.c.h.b16 %v62
  %v560 = vunpack.c.l.b16 %v63
  %v561 = vunpack.c.h.b16 %v63
  %v562 = vunpack.c.l.b16 %v64
  %v563 = vunpack.c.h.b16 %v64
  %v564 = vunpack.c.l.b16 %v65
  %v565 = vunpack.c.h.b16 %v65
  %v566 = vunpack.c.l.b16 %v66
  %v567 = vunpack.c.h.b16 %v66
  %v568 = vunpack.c.l.b16 %v67
  %v569 = vunpack.c.h.b16 %v67
  %v570 = vunpack.c.l.b16 %v68
  %v571 = vunpack.c.h.b16 %v68
  %v572 = vunpack.c.l.b16 %v69
  %v573 = vunpack.c.h.b16 %v69
  %v574 = vunpack.c.l.b16 %v70
  %v575 = vunpack.c.h.b16 %v70
  %v576 = vunpack.c.l.b16 %v71
  %v577 = vunpack.c.h.b16 %v71
  %v578 = vunpack.c.l.b16 %v72
  %v579 = vunpack.c.h.b16 %v72
  %v580 = vunpack.c.l.b16 %v73
  %v581 = vunpack.c.h.b16 %v73
  %v582 = vunpack.c.l.b16 %v74
  %v583 = vunpack.c.h.b16 %v74
  %v584 = vunpack.c.l.b16 %v75
  %v585 = vunpack.c.h.b16 %v75
  %v586 = vunpack.c.l.b16 %v76
  %v587 = vunpack.c.h.b16 %v76
  %v588 = vunpack.c.l.b16 %v77
  %v589 = vunpack.c.h.b16 %v77
  %v590 = vunpack.c.l.b16 %v78
  %v591 = vunpack.c.h.b16 %v78
  %v592 = vunpack.c.l.b16 %v79
  %v593 = vunpack.c.h.b16 %v79
  %v594 = vunpack.c.l.b16 %v80
  %v595 = vunpack.c.h.b16 %v80
  %v596 = vunpack.c.l.b16 %v81
  %v597 = vunpack.c.h.b16 %v81
  %v598 = vunpack.c.l.b16 %v82
  %v599 = vunpack.c.h.b16 %v82
  %v600 = vunpack.c.l.b16 %v83
  %v601 = vunpack.c.h.b16 %v83
  %v602 = vunpack.c.l.b16 %v84
  %v603 = vunpack.c.h.b16 %v84
  %v604 = vunpack.c.l.b16 %v85
  %v605 = vunpack.c.h.b16 %v85
  %v606 = vunpack.c.l.b16 %v86
  %v607 = vunpack.c.h.b16 %v86
  %v608 = vunpack.c.l.b16 %v87
  %v609 = vunpack.c.h.b16 %v87
  %v610 = vunpack.c.l.b16 %v88
  %v611 = vunpack.c.h.b16 %v88
  %v612 = vunpack.c.l.b16 %v89
  %v613 = vunpack.c.h.b16 %v89
  %v614 = vunpack.c.l.b16 %v90
  %v615 = vunpack.c.h.b16 %v90
  %v616 = vunpack.c.l.b16 %v91
  %v617 = vunpack.c.h.b16 %v91
  %v618 = vunpack.c.l.b16 %v92
  %v619 = vunpack.c.h.b16 %v92
  %v620 = vunpack.c.l.b16 %v93
  %v621 = vunpack.c.h.b16 %v93
  %v622 = vunpack.c.l.b16 %v94
  %v623 = vunpack.c.h.b16 %v94
  %v624 = vunpack.c.l.b16 %v95
  %v625 = vunpack.c.h.b16 %v95
  %v626 = vunpack.c.l.b16 %v96
  %v627 = vunpack.c.h.b16 %v96
  %v628 = vunpack.c.l.b16 %v97
  %v629 = vunpack.c.h.b16 %v97
  %v630 = vunpack.c.l.b16 %v98
  %v631 = vunpack.c.h.b16 %v98
  %v632 = vunpack.c.l.b16 %v99
  %v633 = vunpack.c.h.b16 %v99
  %v634 = vunpack.c.l.b16 %v100
  %v635 = vunpack.c.h.b16 %v100
  %v636 = vunpack.c.l.b16 %v101
  %v637 = vunpack.c.h.b16 %v101
  %v638 = vunpack.c.l.b16 %v102
  %v639 = vunpack.c.h.b16 %v102
  %v640 = vunpack.c.l.b16 %v103
  %v641 = vunpack.c.h.b16 %v103
  %v642 = vunpack.c.l.b16 %v104
  %v643 = vunpack.c.h.b16 %v104
  %v644 = vunpack.c.l.b16 %v105
  %v645 = vunpack.c.h.b16 %v105
  %v646 = vunpack.c.l.b16 %v106
  %v647 = vunpack.c.h.b16 %v106
  %v648 = vunpack.c.l.b16 %v107
  %v649 = vunpack.c.h.b16 %v107
  %v650 = vunpack.c.l.b16 %v108
  %v651 = vunpack.c.h.b16 %v108
  %v652 = vunpack.c.l.b16 %v109
  %v653 = vunpack.c.h.b16 %v109
  %v654 = vunpack.c.l.b16 %v110
  %v655 = vunpack.c.h.b16 %v110
  %v656 = vunpack.c.l.b16 %v111
  %v657 = vunpack.c.h.b16 %v111
  %v658 = vunpack.c.l.b16 %v112
  %v659 = vunpack.c.h.b16 %v112
  %v660 = vunpack.c.l.b16 %v113
  %v661 = vunpack.c.h.b16 %v113
  %v662 = vunpack.c.l.b16 %v114
  %v663 = vunpack.c.h.b16 %v114
  %v664 = vunpack.c.l.b16 %v115
  %v665 = vunpack.c.h.b16 %v115
  %v666 = vunpack.c.l.b16 %v116
  %v667 = vunpack.c.h.b16 %v116
  %v668 = vunpack.c.l.b16 %v117
  %v669 = vunpack.c.h.b16 %v117
  %v670 = vunpack.c.l.b16 %v118
  %v671 = vunpack.c.h.b16 %v118
  %v672 = vunpack.c.l.b16 %v119
  %v673 = vunpack.c.h.b16 %v119
  %v674 = vunpack.c.l.b16 %v120
  %v675 = vunpack.c.h.b16 %v120
  %v676 = vunpack.c.l.b16 %v121
  %v677 = vunpack.c.h.b16 %v121
  %v678 = vunpack.c.l.b16 %v122
  %v679 = vunpack.c.h.b16 %v122
  %v680 = vunpack.c.l.b16 %v123
  %v681 = vunpack.c.h.b16 %v123
  %v682 = vunpack.c.l.b16 %v124
  %v683 = vunpack.c.h.b16 %v124
  %v684 = vunpack.c.l.b16 %v125
  %v685 = vunpack.c.h.b16 %v125
  %v686 = vunpack.c.l.b16 %v126
  %v687 = vunpack.c.h.b16 %v126
  %v688 = vunpack.c.l.b16 %v127
  %v689 = vunpack.c.h.b16 %v127
  %v690 = vunpack.c.l.b16 %v128
  %v691 = vunpack.c.h.b16 %v128
  %v692 = vunpack.c.l.b16 %v129
  %v693 = vunpack.c.h.b16 %v129
  %v694 = vunpack.c.l.b16 %v130
  %v695 = vunpack.c.h.b16 %v130
  %v696 = vunpack.c.l.b16 %v131
  %v697 = vunpack.c.h.b16 %v131
  %v698 = vunpack.c.l.b16 %v132
  %v699 = vunpack.c.h.b16 %v132
  %v700 = vunpack.c.l.b16 %v133
  %v701 = vunpack.c.h.b16 %v133
  %v702 = vunpack.c.l.b16 %v134
  %v703 = vunpack.c.h.b16 %v134
  %v704 = vunpack.c.l.b16 %v135
  %v705 = vunpack.c.h.b16 %v135
  %v706 = vunpack.c.l.b16 %v136
  %v707 = vunpack.c.h.b16 %v136
  %v708 = vunpack.c.l.b16 %v137
  %v709 = vunpack.c.h.b16 %v137
  %v710 = vunpack.c.l.b16 %v138
  %v711 = vunpack.c.h.b16 %v138
  %v712 = vunpack.c.l.b16 %v139
  %v713 = vunpack.c.h.b16 %v139
  %v714 = vunpack.c.l.b16 %v140
  %v715 = vunpack.c.h.b16 %v140
  %v716 = vunpack.c.l.b16 %v141
  %v717 = vunpack.c.h.b16 %v141
  %v718 = vunpack.c.l.b16 %v142
  %v719 = vunpack.c.h.b16 %v142
  %v720 = vunpack.c.l.b16 %v143
  %v721 = vunpack.c.h.b16 %v143
  %v722 = vunpack.c.l.b16 %v144
  %v723 = vunpack.c.h.b16 %v144
  %v724 = vunpack.c.l.b16 %v145
  %v725 = vunpack.c.h.b16 %v145
  %v726 = vunpack.c.l.b16 %v146
  %v727 = vunpack.c.h.b16 %v146
  %v728 = vunpack.c.l.b16 %v147
  %v729 = vunpack.c.h.b16 %v147
  %v730 = vunpack.c.l.b16 %v148
  %v731 = vunpack.c.h.b16 %v148
  %v732 = vunpack.c.l.b16 %v149
  %v733 = vunpack.c.h.b16 %v149
  %v734 = vunpack.c.l.b16 %v150
  %v735 = vunpack.c.h.b16 %v150
  %v736 = vunpack.c.l.b16 %v151
  %v737 = vunpack.c.h.b16 %v151
  %v738 = vunpack.c.l.b16 %v152
  %v739 = vunpack.c.h.b16 %v152
  %v740 = vunpack.c.l.b16 %v153
  %v741 = vunpack.c.h.b16 %v153
  %v742 = vunpack.c.l.b16 %v154
  %v743 = vunpack.c.h.b16 %v154
  %v744 = vunpack.c.l.b16 %v155
  %v745 = vunpack.c.h.b16 %v155
  %v746 = vunpack.c.l.b16 %v156
  %v747 = vunpack.c.h.b16 %v156
  %v748 = vunpack.c.l.b16 %v157
  %v749 = vunpack.c.h.b16 %v157
  %v750 = vunpack.c.l.b16 %v158
  %v751 = vunpack.c.h.b16 %v158
  %v752 = vunpack.c.l.b16 %v159
  %v753 = vunpack.c.h.b16 %v159
  %v754 = vunpack.c.l.b16 %v160
  %v755 = vunpack.c.h.b16 %v160
  %v756 = vunpack.c.l.b16 %v161
  %v757 = vunpack.c.h.b16 %v161
  %v758 = vunpack.c.l.b16 %v162
  %v759 = vunpack.c.h.b16 %v162
  %v760 = vunpack.c.l.b16 %v163
  %v761 = vunpack.c.h.b16 %v163
  %v762 = vunpack.c.l.b16 %v164
  %v763 = vunpack.c.h.b16 %v164
  %v764 = vunpack.c.l.b16 %v165
  %v765 = vunpack.c.h.b16 %v165
  %v766 = vunpack.c.l.b16 %v166
  %v767 = vunpack.c.h.b16 %v166
  %v768 = vunpack.c.l.b16 %v167
  %v769 = vunpack.c.h.b16 %v167
  %v770 = vunpack.c.l.b16 %v168
  %v771 = vunpack.c.h.b16 %v168
  %v772 = vunpack.c.l.b16 %v169
  %v773 = vunpack.c.h.b16 %v169
  %v774 = vunpack.c.l.b16 %v170
  %v775 = vunpack.c.h.b16 %v170
  %v776 = vunpack.c.l.b16 %v171
  %v777 = vunpack.c.h.b16 %v171
  %v778 = vunpack.c.l.b16 %v172
  %v779 = vunpack.c.h.b16 %v172
  %v780 = vunpack.c.l.b16 %v173
  %v781 = vunpack.c.h.b16 %v173
  %v782 = vunpack.c.l.b16 %v174
  %v783 = vunpack.c.h.b16 %v174
  %v784 = vunpack.c.l.b16 %v175
  %v785 = vunpack.c.h.b16 %v175
  %v786 = vunpack.c.l.b16 %v176
  %v787 = vunpack.c.h.b16 %v176
  %v788 = vunpack.c.l.b16 %v177
  %v789 = vunpack.c.h.b16 %v177
  %v790 = vunpack.c.l.b16 %v178
  %v791 = vunpack.c.h.b16 %v178
  %v792 = vunpack.c.l.b16 %v179
  %v793 = vunpack.c.h.b16 %v179
  %v794 = vunpack.c.l.b16 %v180
  %v795 = vunpack.c.h.b16 %v180
  %v796 = vunpack.c.l.b16 %v181
  %v797 = vunpack.c.h.b16 %v181
  %v798 = vunpack.c.l.b16 %v182
  %v799 = vunpack.c.h.b16 %v182
  %v800 = vunpack.c.l.b16 %v183
  %v801 = vunpack.c.h.b16 %v183
  %v802 = vunpack.c.l.b16 %v184
  %v803 = vunpack.c.h.b16 %v184
  %v804 = vunpack.c.l.b16 %v185
  %v805 = vunpack.c.h.b16 %v185
  %v806 = vunpack.c.l.b16 %v186
  %v807 = vunpack.c.h.b16 %v186
  %v808 = vunpack.c.l.b16 %v187
  %v809 = vunpack.c.h.b16 %v187
  %v810 = vunpack.c.l.b16 %v188
  %v811 = vunpack.c.h.b16 %v188
  %v812 = vunpack.c.l.b16 %v189
  %v813 = vunpack.c.h.b16 %v189
  %v814 = vunpack.c.l.b16 %v190
  %v815 = vunpack.c.h.b16 %v190
  %v816 = vunpack.c.l.b16 %v191
  %v817 = vunpack.c.h.b16 %v191
  %v818 = vunpack.c.l.b16 %v192
  %v819 = vunpack.c.h.b16 %v192
  %v820 = vunpack.c.l.b16 %v193
  %v821 = vunpack.c.h.b16 %v193
  %v822 = vunpack.c.l.b16 %v194
  %v823 = vunpack.c.h.b16 %v194
  %v824 = vunpack.c.l.b16 %v195
  %v825 = vunpack.c.h.b16 %v195
  %v826 = vunpack.c.l.b16 %v196
  %v827 = vunpack.c.h.b16 %v196
  %v828 = vunpack.c.l.b16 %v197
  %v829 = vunpack.c.h.b16 %v197
  %v830 = vunpack.c.l.b16 %v198
  %v831 = vunpack.c.h.b16 %v198
  %v832 = vunpack.c.l.b16 %v199
  %v833 = vunpack.c.h.b16 %v199
  %v834 = vunpack.c.l.b16 %v200
  %v835 = vunpack.c.h.b16 %v200
  %v836 = vunpack.c.l.b16 %v201
  %v837 = vunpack.c.h.b16 %v201
  %v838 = vunpack.c.l.b16 %v202
  %v839 = vunpack.c.h.b16 %v202
  %v840 = vunpack.c.l.b16 %v203
  %v841 = vunpack.c.h.b16 %v203
  %v842 = vunpack.c.l.b16 %v204
  %v843 = vunpack.c.h.b16 %v204
  %v844 = vunpack.c.l.b16 %v205
  %v845 = vunpack.c.h.b16 %v205
  %v846 = vunpack.c.l.b16 %v206
  %v847 = vunpack.c.h.b16 %v206
  %v848 = vunpack.c.l.b16 %v207
  %v849 = vunpack.c.h.b16 %v207
  %v850 = vunpack.c.l.b16 %v208
  %v851 = vunpack.c.h.b16 %v208
  %v852 = vunpack.c.l.b16 %v209
  %v853 = vunpack.c.h.b16 %v209
  %v854 = vunpack.c.l.b16 %v210
  %v855 = vunpack.c.h.b16 %v210
  %v856 = vunpack.c.l.b16 %v211
  %v857 = vunpack.c.h.b16 %v211
  %v858 = vunpack.c.l.b16 %v212
  %v859 = vunpack.c.h.b16 %v212
  %v860 = vunpack.c.l.b16 %v213
  %v861 = vunpack.c.h.b16 %v213
  %v862 = vunpack.c.l.b16 %v214
  %v863 = vunpack.c.h.b16 %v214
  %v864 = vunpack.c.l.b16 %v215
  %v865 = vunpack.c.h.b16 %v215
  %v866 = vunpack.c.l.b16 %v216
  %v867 = vunpack.c.h.b16 %v216
  %v868 = vunpack.c.l.b16 %v217
  %v869 = vunpack.c.h.b16 %v217
  %v870 = vunpack.c.l.b16 %v218
  %v871 = vunpack.c.h.b16 %v218
  %v872 = vunpack.c.l.b16 %v219
  %v873 = vunpack.c.h.b16 %v219
  %v874 = vunpack.c.l.b16 %v220
  %v875 = vunpack.c.h.b16 %v220
  %v876 = vunpack.c.l.b16 %v221
  %v877 = vunpack.c.h.b16 %v221
  %v878 = vunpack.c.l.b16 %v222
  %v879 = vunpack.c.h.b16 %v222
  %v880 = vpack.c.b16 %v484, %v480
  %v881 = vpack.c.b16 %v485, %v481
  %v882 = vpack.c.b16 %v486, %v482
  %v883 = vpack.c.b16 %v487, %v483
  %v884 = vpack.c.b16 %v492, %v488
  %v885 = vpack.c.b16 %v493, %v489
  %v886 = vpack.c.b16 %v494, %v490
  %v887 = vpack.c.b16 %v495, %v491
  %v888 = vpack.c.b16 %v500, %v496
  %v889 = vpack.c.b16 %v501, %v497
  %v890 = vpack.c.b16 %v502, %v498
  %v891 = vpack.c.b16 %v503, %v499
  %v892 = vpack.c.b16 %v508, %v504
  %v893 = vpack.c.b16 %v509, %v505
  %v894 = vpack.c.b16 %v510, %v506
  %v895 = vpack.c.b16 %v511, %v507
  %v896 = vpack.c.b16 %v516, %v512
  %v897 = vpack.c.b16 %v517, %v513
  %v898 = vpack.c.b16 %v518, %v514
  %v899 = vpack.c.b16 %v519, %v515
  %v900 = vpack.c.b16 %v524, %v520
  %v901 = vpack.c.b16 %v525, %v521
  %v902 = vpack.c.b16 %v526, %v522
  %v903 = vpack.c.b16 %v527, %v523
  %v904 = vpack.c.b16 %v532, %v528
  %v905 = vpack.c.b16 %v533, %v529
  %v906 = vpack.c.b16 %v534, %v530
  %v907 = vpack.c.b16 %v535, %v531
  %v908 = vpack.c.b16 %v540, %v536
  %v909 = vpack.c.b16 %v541, %v537
  %v910 = vpack.c.b16 %v542, %v538
  %v911 = vpack.c.b16 %v543, %v539
  %v912 = vpack.c.b16 %v548, %v544
  %v913 = vpack.c.b16 %v549, %v545
  %v914 = vpack.c.b16 %v550, %v546
  %v915 = vpack.c.b16 %v551, %v547
  %v916 = vpack.c.b16 %v556, %v552
  %v917 = vpack.c.b16 %v557, %v553
  %v918 = vpack.c.b16 %v558, %v554
  %v919 = vpack.c.b16 %v559, %v555
  %v920 = vpack.c.b16 %v564, %v560
  %v921 = vpack.c.b16 %v565, %v561
  %v922 = vpack.c.b16 %v566, %v562
  %v923 = vpack.c.b16 %v567, %v563
  %v924 = vpack.c.b16 %v572, %v568
  %v925 = vpack.c.b16 %v573, %v569
  %v926 = vpack.c.b16 %v574, %v570
  %v927 = vpack.c.b16 %v575, %v571
  %v928 = vpack.c.b16 %v580, %v576
  %v929 = vpack.c.b16 %v581, %v577
  %v930 = vpack.c.b16 %v582, %v578
  %v931 = vpack.c.b16 %v583, %v579
  %v932 = vpack.c.b16 %v588, %v584
  %v933 = vpack.c.b16 %v589, %v585
  %v934 = vpack.c.b16 %v590, %v586
  %v935 = vpack.c.b16 %v591, %v587
  %v936 = vpack.c.b16 %v596, %v592
  %v937 = vpack.c.b16 %v597, %v593
  %v938 = vpack.c.b16 %v598, %v594
  %v939 = vpack.c.b16 %v599, %v595
  %v940 = vpack.c.b16 %v604, %v600
  %v941 = vpack.c.b16 %v605, %v601
  %v942 = vpack.c.b16 %v606, %v602
  %v943 = vpack.c.b16 %v607, %v603
  %v944 = vpack.c.b16 %v612, %v608
  %v945 = vpack.c.b16 %v613, %v609
  %v946 = vpack.c.b16 %v614, %v610
  %v947 = vpack.c.b16 %v615, %v611
  %v948 = vpack.c.b16 %v620, %v616
  %v949 = vpack.c.b16 %v621, %v617
  %v950 = vpack.c.b16 %v622, %v618
  %v951 = vpack.c.b16 %v623, %v619
  %v952 = vpack.c.b16 %v628, %v624
  %v953 = vpack.c.b16 %v629, %v625
  %v954 = vpack.c.b16 %v630, %v626
  %v955 = vpack.c.b16 %v631, %v627
  %v956 = vpack.c.b16 %v636, %v632
  %v957 = vpack.c.b16 %v637, %v633
  %v958 = vpack.c.b16 %v638, %v634
  %v959 = vpack.c.b16 %v639, %v635
  %v960 = vpack.c.b16 %v644, %v640
  %v961 = vpack.c.b16 %v645, %v641
  %v962 = vpack.c.b16 %v646, %v642
  %v963 = vpack.c.b16 %v647, %v643
  %v964 = vpack.c.b16 %v652, %v648
  %v965 = vpack.c.b16 %v653, %v649
  %v966 = vpack.c.b16 %v654, %v650
  %v967 = vpack.c.b16 %v655, %v651
  %v968 = vpack.c.b16 %v660, %v656
  %v969 = vpack.c.b16 %v661, %v657
  %v970 = vpack.c.b16 %v662, %v658
  %v971 = vpack.c.b16 %v663, %v659
  %v972 = vpack.c.b16 %v668, %v664
  %v973 = vpack.c.b16 %v669, %v665
  %v974 = vpack.c.b16 %v670, %v666
  %v975 = vpack.c.b16 %v671, %v667
  %v976 = vpack.c.b16 %v676, %v672
  %v977 = vpack.c.b16 %v677, %v673
  %v978 = vpack.c.b16 %v678, %v674
  %v979 = vpack.c.b16 %v679, %v675
  %v980 = vpack.c.b16 %v684, %v680
  %v981 = vpack.c.b16 %v685, %v681
  %v982 = vpack.c.b16 %v686, %v682
  %v983 = vpack.c.b16 %v687, %v683
  %v984 = vpack.c.b16 %v692, %v688
  %v985 = vpack.c.b16 %v693, %v689
  %v986 = vpack.c.b16 %v694, %v690
  %v987 = vpack.c.b16 %v695, %v691
  %v988 = vpack.c.b16 %v700, %v696
  %v989 = vpack.c.b16 %v701, %v697
  %v990 = vpack.c.b16 %v702, %v698
  %v991 = vpack.c.b16 %v703, %v699
  %v992 = vpack.c.b16 %v708, %v704
  %v993 = vpack.c.b16 %v709, %v705
  %v994 = vpack.c.b16 %v710, %v706
  %v995 = vpack.c.b16 %v711, %v707
  %v996 = vpack.c.b16 %v716, %v712
  %v997 = vpack.c.b16 %v717, %v713
  %v998 = vpack.c.b16 %v718, %v714
  %v999 = vpack.c.b16 %v719, %v715
  %v1000 = vpack.c.b16 %v724, %v720
  %v1001 = vpack.c.b16 %v725, %v721
  %v1002 = vpack.c.b16 %v726, %v722
  %v1003 = vpack.c.b16 %v727, %v723
  %v1004 = vpack.c.b16 %v732, %v728
  %v1005 = vpack.c.b16 %v733, %v729
  %v1006 = vpack.c.b16 %v734, %v730
  %v1007 = vpack.c.b16 %v735, %v731
  %v1008 = vpack.c.b16 %v740, %v736
  %v1009 = vpack.c.b16 %v741, %v737
  %v1010 = vpack.c.b16 %v742, %v738
  %v1011 = vpack.c.b16 %v743, %v739
  %v1012 = vpack.c.b16 %v748, %v744
  %v1013 = vpack.c.b16 %v749, %v745
  %v1014 = vpack.c.b16 %v750, %v746
  %v1015 = vpack.c.b16 %v751, %v747
  %v1016 = vpack.c.b16 %v756, %v752
  %v1017 = vpack.c.b16 %v757, %v753
  %v1018 = vpack.c.b16 %v758, %v754
  %v1019 = vpack.c.b16 %v759, %v755
  %v1020 = vpack.c.b16 %v764, %v760
  %v1021 = vpack.c.b16 %v765, %v761
  %v1022 = vpack.c.b16 %v766, %v762
  %v1023 = vpack.c.b16 %v767, %v763
  %v1024 = vpack.c.b16 %v772, %v768
  %v1025 = vpack.c.b16 %v773, %v769
  %v1026 = vpack.c.b16 %v774, %v770
  %v1027 = vpack.c.b16 %v775, %v771
  %v1028 = vpack.c.b16 %v780, %v776
  %v1029 = vpack.c.b16 %v781, %v777
  %v1030 = vpack.c.b16 %v782, %v778
  %v1031 = vpack.c.b16 %v783, %v779
  %v1032 = vpack.c.b16 %v788, %v784
  %v1033 = vpack.c.b16 %v789, %v785
  %v1034 = vpack.c.b16 %v790, %v786
  %v1035 = vpack.c.b16 %v791, %v787
  %v1036 = vpack.c.b16 %v796, %v792
  %v1037 = vpack.c.b16 %v797, %v793
  %v1038 = vpack.c.b16 %v798, %v794
  %v1039 = vpack.c.b16 %v799, %v795
  %v1040 = vpack.c.b16 %v804, %v800
  %v1041 = vpack.c.b16 %v805, %v801
  %v1042 = vpack.c.b16 %v806, %v802
  %v1043 = vpack.c.b16 %v807, %v803
  %v1044 = vpack.c.b16 %v812, %v808
  %v1045 = vpack.c.b16 %v813, %v809
  %v1046 = vpack.c.b16 %v814, %v810
  %v1047 = vpack.c.b16 %v815, %v811
  %v1048 = vpack.c.b16 %v820, %v816
  %v1049 = vpack.c.b16 %v821, %v817
  %v1050 = vpack.c.b16 %v822, %v818
  %v1051 = vpack.c.b16 %v823, %v819
  %v1052 = vpack.c.b16 %v828, %v824
  %v1053 = vpack.c.b16 %v829, %v825
  %v1054 = vpack.c.b16 %v830, %v826
  %v1055 = vpack.c.b16 %v831, %v827
  %v1056 = vpack.c.b16 %v836, %v832
  %v1057 = vpack.c.b16 %v837, %v833
  %v1058 = vpack.c.b16 %v838, %v834
  %v1059 = vpack.c.b16 %v839, %v835
  %v1060 = vpack.c.b16 %v844, %v840
  %v1061 = vpack.c.b16 %v845, %v841
  %v1062 = vpack.c.b16 %v846, %v842
  %v1063 = vpack.c.b16 %v847, %v843
  %v1064 = vpack.c.b16 %v852, %v848
  %v1065 = vpack.c.b16 %v853, %v849
  %v1066 = vpack.c.b16 %v854, %v850
  %v1067 = vpack.c.b16 %v855, %v851
  %v1068 = vpack.c.b16 %v860, %v856
  %v1069 = vpack.c.b16 %v861, %v857
  %v1070 = vpack.c.b16 %v862, %v858
  %v1071 = vpack.c.b16 %v863, %v859
  %v1072 = vpack.c.b16 %v868, %v864
  %v1073 = vpack.c.b16 %v869, %v865
  %v1074 = vpack.c.b16 %v870, %v866
  %v1075 = vpack.c.b16 %v871, %v867
  %v1076 = vpack.c.b16 %v876, %v872
  %v1077 = vpack.c.b16 %v877, %v873
  %v1078 = vpack.c.b16 %v878, %v874
  %v1079 = vpack.c.b16 %v879, %v875
  %vm1280 = vcmask 261120
  %v1282 = vsel %vm1280, %v273, 0
  %1284 = vmatprep.subr.bf16.mxu0 %v881
  %1285 = vmatpush1.bf16.msra.mxu0 %v880
  %1286 = vmatprep.subr.bf16.mxu0 %v885
  %1287 = vmatpush1.bf16.msra.mxu0 %v884
  %1288 = vmatprep.subr.bf16.mxu0 %v889
  %1289 = vmatpush1.bf16.msra.mxu0 %v888
  %1290 = vmatprep.subr.bf16.mxu0 %v893
  %1291 = vmatpush1.bf16.msra.mxu0 %v892
  %1292 = vmatprep.subr.bf16.mxu0 %v897
  %1293 = vmatpush1.bf16.msra.mxu0 %v896
  %1294 = vmatprep.subr.bf16.mxu0 %v901
  %1295 = vmatpush1.bf16.msra.mxu0 %v900
  %1296 = vmatprep.subr.bf16.mxu0 %v905
  %1297 = vmatpush1.bf16.msra.mxu0 %v904
  %1298 = vmatprep.subr.bf16.mxu0 %v909
  %1299 = vmatpush1.bf16.msra.mxu0 %v908
  %1300 = vmatprep.subr.bf16.mxu0 %v913
  %1301 = vmatpush1.bf16.msra.mxu0 %v912
  %1302 = vmatprep.subr.bf16.mxu0 %v917
  %1303 = vmatpush1.bf16.msra.mxu0 %v916
  %1304 = vmatprep.subr.bf16.mxu0 %v921
  %1305 = vmatpush1.bf16.msra.mxu0 %v920
  %1306 = vmatprep.subr.bf16.mxu0 %v925
  %1307 = vmatpush1.bf16.msra.mxu0 %v924
  %1308 = vmatprep.subr.bf16.mxu0 %v929
  %1309 = vmatpush1.bf16.msra.mxu0 %v928
  %1310 = vmatprep.subr.bf16.mxu0 %v933
  %1311 = vmatpush1.bf16.msra.mxu0 %v932
  %1312 = vmatprep.subr.bf16.mxu0 %v937
  %1313 = vmatpush1.bf16.msra.mxu0 %v936
  %1314 = vmatprep.subr.bf16.mxu0 %v941
  %1315 = vmatpush1.bf16.msra.mxu0 %v940
  %1316 = vmatprep.mubr.bf16.mxu0 %v268
  %1317 = vmatmul.mubr.bf16.gmra.mrb[0].mxu0 %v267
  %v1318 = vpop.f32.mrb[0].mxu0
  %v1319 = vadd.f32 %v228, %v1318
  %v1320 = vpop.f32.mrb[0].mxu0
  %v1321 = vadd.f32 %v232, %v1320
  %v1322 = vpop.f32.mrb[0].mxu0
  %v1323 = vadd.f32 %v228, %v1322
  %v1324 = vpop.f32.mrb[0].mxu0
  %v1325 = vadd.f32 %v232, %v1324
  %1326 = vdwg.mxu0
  %1327 = vmatprep.subr.bf16.mxu0 %v945
  %1328 = vmatpush1.bf16.msra.mxu0 %v944
  %1329 = vmatprep.subr.bf16.mxu0 %v949
  %1330 = vmatpush1.bf16.msra.mxu0 %v948
  %1331 = vmatprep.subr.bf16.mxu0 %v953
  %1332 = vmatpush1.bf16.msra.mxu0 %v952
  %1333 = vmatprep.subr.bf16.mxu0 %v957
  %1334 = vmatpush1.bf16.msra.mxu0 %v956
  %1335 = vmatprep.subr.bf16.mxu0 %v961
  %1336 = vmatpush1.bf16.msra.mxu0 %v960
  %1337 = vmatprep.subr.bf16.mxu0 %v965
  %1338 = vmatpush1.bf16.msra.mxu0 %v964
  %1339 = vmatprep.subr.bf16.mxu0 %v969
  %1340 = vmatpush1.bf16.msra.mxu0 %v968
  %1341 = vmatprep.subr.bf16.mxu0 %v973
  %1342 = vmatpush1.bf16.msra.mxu0 %v972
  %1343 = vmatprep.subr.bf16.mxu0 %v977
  %1344 = vmatpush1.bf16.msra.mxu0 %v976
  %1345 = vmatprep.subr.bf16.mxu0 %v981
  %1346 = vmatpush1.bf16.msra.mxu0 %v980
  %1347 = vmatprep.subr.bf16.mxu0 %v985
  %1348 = vmatpush1.bf16.msra.mxu0 %v984
  %1349 = vmatprep.subr.bf16.mxu0 %v989
  %1350 = vmatpush1.bf16.msra.mxu0 %v988
  %1351 = vmatprep.subr.bf16.mxu0 %v993
  %1352 = vmatpush1.bf16.msra.mxu0 %v992
  %1353 = vmatprep.subr.bf16.mxu0 %v997
  %1354 = vmatpush1.bf16.msra.mxu0 %v996
  %1355 = vmatprep.subr.bf16.mxu0 %v1001
  %1356 = vmatpush1.bf16.msra.mxu0 %v1000
  %1357 = vmatprep.subr.bf16.mxu0 %v1005
  %1358 = vmatpush1.bf16.msra.mxu0 %v1004
  %1359 = vmatprep.mubr.bf16.mxu0 %v270
  %1360 = vmatmul.mubr.bf16.gmra.mrb[0].mxu0 %v269
  %v1361 = vpop.f32.mrb[0].mxu0
  %v1362 = vadd.f32 %v1319, %v1361
  %v1363 = vpop.f32.mrb[0].mxu0
  %v1364 = vadd.f32 %v1321, %v1363
  %v1365 = vpop.f32.mrb[0].mxu0
  %v1366 = vadd.f32 %v1323, %v1365
  %v1367 = vpop.f32.mrb[0].mxu0
  %v1368 = vadd.f32 %v1325, %v1367
  %1369 = vdwg.mxu0
  %1370 = vmatprep.subr.bf16.mxu0 %v1009
  %1371 = vmatpush1.bf16.msra.mxu0 %v1008
  %1372 = vmatprep.subr.bf16.mxu0 %v1013
  %1373 = vmatpush1.bf16.msra.mxu0 %v1012
  %1374 = vmatprep.subr.bf16.mxu0 %v1017
  %1375 = vmatpush1.bf16.msra.mxu0 %v1016
  %1376 = vmatprep.subr.bf16.mxu0 %v1021
  %1377 = vmatpush1.bf16.msra.mxu0 %v1020
  %1378 = vmatprep.subr.bf16.mxu0 %v1025
  %1379 = vmatpush1.bf16.msra.mxu0 %v1024
  %1380 = vmatprep.subr.bf16.mxu0 %v1029
  %1381 = vmatpush1.bf16.msra.mxu0 %v1028
  %1382 = vmatprep.subr.bf16.mxu0 %v1033
  %1383 = vmatpush1.bf16.msra.mxu0 %v1032
  %1384 = vmatprep.subr.bf16.mxu0 %v1037
  %1385 = vmatpush1.bf16.msra.mxu0 %v1036
  %1386 = vmatprep.subr.bf16.mxu0 %v1041
  %1387 = vmatpush1.bf16.msra.mxu0 %v1040
  %1388 = vmatprep.subr.bf16.mxu0 %v1045
  %1389 = vmatpush1.bf16.msra.mxu0 %v1044
  %1390 = vmatprep.subr.bf16.mxu0 %v1049
  %1391 = vmatpush1.bf16.msra.mxu0 %v1048
  %1392 = vmatprep.subr.bf16.mxu0 %v1053
  %1393 = vmatpush1.bf16.msra.mxu0 %v1052
  %1394 = vmatprep.subr.bf16.mxu0 %v1057
  %1395 = vmatpush1.bf16.msra.mxu0 %v1056
  %1396 = vmatprep.subr.bf16.mxu0 %v1061
  %1397 = vmatpush1.bf16.msra.mxu0 %v1060
  %1398 = vmatprep.subr.bf16.mxu0 %v1065
  %1399 = vmatpush1.bf16.msra.mxu0 %v1064
  %1400 = vmatprep.subr.bf16.mxu0 %v1069
  %1401 = vmatpush1.bf16.msra.mxu0 %v1068
  %1402 = vmatprep.mubr.bf16.mxu0 %v272
  %1403 = vmatmul.mubr.bf16.gmra.mrb[0].mxu0 %v271
  %v1404 = vpop.f32.mrb[0].mxu0
  %v1405 = vadd.f32 %v1362, %v1404
  %v1406 = vpop.f32.mrb[0].mxu0
  %v1407 = vadd.f32 %v1364, %v1406
  %v1408 = vpop.f32.mrb[0].mxu0
  %v1409 = vadd.f32 %v1366, %v1408
  %v1410 = vpop.f32.mrb[0].mxu0
  %v1411 = vadd.f32 %v1368, %v1410
  %1412 = vdwg.mxu0
  %1413 = vmatprep.subr.bf16.mxu0 %v1073
  %1414 = vmatpush1.bf16.msra.mxu0 %v1072
  %1415 = vmatprep.subr.bf16.mxu0 %v1077
  %1416 = vmatpush1.bf16.msra.mxu0 %v1076
  %1417 = vmatprep.subr.bf16.mxu0 0
  %1418 = vmatpush1.bf16.msra.mxu0 0
  %1419 = vmatprep.subr.bf16.mxu0 0
  %1420 = vmatpush1.bf16.msra.mxu0 0
  %1421 = vmatprep.subr.bf16.mxu0 0
  %1422 = vmatpush1.bf16.msra.mxu0 0
  %1423 = vmatprep.subr.bf16.mxu0 0
  %1424 = vmatpush1.bf16.msra.mxu0 0
  %1425 = vmatprep.subr.bf16.mxu0 0
  %1426 = vmatpush1.bf16.msra.mxu0 0
  %1427 = vmatprep.subr.bf16.mxu0 0
  %1428 = vmatpush1.bf16.msra.mxu0 0
  %1429 = vmatprep.subr.bf16.mxu0 0
  %1430 = vmatpush1.bf16.msra.mxu0 0
  %1431 = vmatprep.subr.bf16.mxu0 0
  %1432 = vmatpush1.bf16.msra.mxu0 0
  %1433 = vmatprep.subr.bf16.mxu0 0
  %1434 = vmatpush1.bf16.msra.mxu0 0
  %1435 = vmatprep.subr.bf16.mxu0 0
  %1436 = vmatpush1.bf16.msra.mxu0 0
  %1437 = vmatprep.subr.bf16.mxu0 0
  %1438 = vmatpush1.bf16.msra.mxu0 0
  %1439 = vmatprep.subr.bf16.mxu0 0
  %1440 = vmatpush1.bf16.msra.mxu0 0
  %1441 = vmatprep.subr.bf16.mxu0 0
  %1442 = vmatpush1.bf16.msra.mxu0 0
  %1443 = vmatprep.subr.bf16.mxu0 0
  %1444 = vmatpush1.bf16.msra.mxu0 0
  %1445 = vmatprep.mubr.bf16.mxu0 0
  %1446 = vmatmul.mubr.bf16.gmra.mrb[0].mxu0 %v1282
  %v1447 = vpop.f32.mrb[0].mxu0
  %v1448 = vadd.f32 %v1405, %v1447
  %v1449 = vpop.f32.mrb[0].mxu0
  %v1450 = vadd.f32 %v1407, %v1449
  %v1451 = vpop.f32.mrb[0].mxu0
  %v1452 = vadd.f32 %v1409, %v1451
  %v1453 = vpop.f32.mrb[0].mxu0
  %v1454 = vadd.f32 %v1411, %v1453
  %1455 = vdwg.mxu0
  %1456 = vmatprep.subr.bf16.mxu0 %v883
  %1457 = vmatpush1.bf16.msra.mxu0 %v882
  %1458 = vmatprep.subr.bf16.mxu0 %v887
  %1459 = vmatpush1.bf16.msra.mxu0 %v886
  %1460 = vmatprep.subr.bf16.mxu0 %v891
  %1461 = vmatpush1.bf16.msra.mxu0 %v890
  %1462 = vmatprep.subr.bf16.mxu0 %v895
  %1463 = vmatpush1.bf16.msra.mxu0 %v894
  %1464 = vmatprep.subr.bf16.mxu0 %v899
  %1465 = vmatpush1.bf16.msra.mxu0 %v898
  %1466 = vmatprep.subr.bf16.mxu0 %v903
  %1467 = vmatpush1.bf16.msra.mxu0 %v902
  %1468 = vmatprep.subr.bf16.mxu0 %v907
  %1469 = vmatpush1.bf16.msra.mxu0 %v906
  %1470 = vmatprep.subr.bf16.mxu0 %v911
  %1471 = vmatpush1.bf16.msra.mxu0 %v910
  %1472 = vmatprep.subr.bf16.mxu0 %v915
  %1473 = vmatpush1.bf16.msra.mxu0 %v914
  %1474 = vmatprep.subr.bf16.mxu0 %v919
  %1475 = vmatpush1.bf16.msra.mxu0 %v918
  %1476 = vmatprep.subr.bf16.mxu0 %v923
  %1477 = vmatpush1.bf16.msra.mxu0 %v922
  %1478 = vmatprep.subr.bf16.mxu0 %v927
  %1479 = vmatpush1.bf16.msra.mxu0 %v926
  %1480 = vmatprep.subr.bf16.mxu0 %v931
  %1481 = vmatpush1.bf16.msra.mxu0 %v930
  %1482 = vmatprep.subr.bf16.mxu0 %v935
  %1483 = vmatpush1.bf16.msra.mxu0 %v934
  %1484 = vmatprep.subr.bf16.mxu0 %v939
  %1485 = vmatpush1.bf16.msra.mxu0 %v938
  %1486 = vmatprep.subr.bf16.mxu0 %v943
  %1487 = vmatpush1.bf16.msra.mxu0 %v942
  %1488 = vmatprep.mubr.bf16.mxu0 %v268
  %1489 = vmatmul.mubr.bf16.gmra.mrb[0].mxu0 %v267
  %v1490 = vpop.f32.mrb[0].mxu0
  %v1491 = vadd.f32 %v236, %v1490
  %v1492 = vpop.f32.mrb[0].mxu0
  %v1493 = vadd.f32 %v240, %v1492
  %v1494 = vpop.f32.mrb[0].mxu0
  %v1495 = vadd.f32 %v236, %v1494
  %v1496 = vpop.f32.mrb[0].mxu0
  %v1497 = vadd.f32 %v240, %v1496
  %1498 = vdwg.mxu0
  %1499 = vmatprep.subr.bf16.mxu0 %v947
  %1500 = vmatpush1.bf16.msra.mxu0 %v946
  %1501 = vmatprep.subr.bf16.mxu0 %v951
  %1502 = vmatpush1.bf16.msra.mxu0 %v950
  %1503 = vmatprep.subr.bf16.mxu0 %v955
  %1504 = vmatpush1.bf16.msra.mxu0 %v954
  %1505 = vmatprep.subr.bf16.mxu0 %v959
  %1506 = vmatpush1.bf16.msra.mxu0 %v958
  %1507 = vmatprep.subr.bf16.mxu0 %v963
  %1508 = vmatpush1.bf16.msra.mxu0 %v962
  %1509 = vmatprep.subr.bf16.mxu0 %v967
  %1510 = vmatpush1.bf16.msra.mxu0 %v966
  %1511 = vmatprep.subr.bf16.mxu0 %v971
  %1512 = vmatpush1.bf16.msra.mxu0 %v970
  %1513 = vmatprep.subr.bf16.mxu0 %v975
  %1514 = vmatpush1.bf16.msra.mxu0 %v974
  %1515 = vmatprep.subr.bf16.mxu0 %v979
  %1516 = vmatpush1.bf16.msra.mxu0 %v978
  %1517 = vmatprep.subr.bf16.mxu0 %v983
  %1518 = vmatpush1.bf16.msra.mxu0 %v982
  %1519 = vmatprep.subr.bf16.mxu0 %v987
  %1520 = vmatpush1.bf16.msra.mxu0 %v986
  %1521 = vmatprep.subr.bf16.mxu0 %v991
  %1522 = vmatpush1.bf16.msra.mxu0 %v990
  %1523 = vmatprep.subr.bf16.mxu0 %v995
  %1524 = vmatpush1.bf16.msra.mxu0 %v994
  %1525 = vmatprep.subr.bf16.mxu0 %v999
  %1526 = vmatpush1.bf16.msra.mxu0 %v998
  %1527 = vmatprep.subr.bf16.mxu0 %v1003
  %1528 = vmatpush1.bf16.msra.mxu0 %v1002
  %1529 = vmatprep.subr.bf16.mxu0 %v1007
  %1530 = vmatpush1.bf16.msra.mxu0 %v1006
  %1531 = vmatprep.mubr.bf16.mxu0 %v270
  %1532 = vmatmul.mubr.bf16.gmra.mrb[0].mxu0 %v269
  %v1533 = vpop.f32.mrb[0].mxu0
  %v1534 = vadd.f32 %v1491, %v1533
  %v1535 = vpop.f32.mrb[0].mxu0
  %v1536 = vadd.f32 %v1493, %v1535
  %v1537 = vpop.f32.mrb[0].mxu0
  %v1538 = vadd.f32 %v1495, %v1537
  %v1539 = vpop.f32.mrb[0].mxu0
  %v1540 = vadd.f32 %v1497, %v1539
  %1541 = vdwg.mxu0
  %1542 = vmatprep.subr.bf16.mxu0 %v1011
  %1543 = vmatpush1.bf16.msra.mxu0 %v1010
  %1544 = vmatprep.subr.bf16.mxu0 %v1015
  %1545 = vmatpush1.bf16.msra.mxu0 %v1014
  %1546 = vmatprep.subr.bf16.mxu0 %v1019
  %1547 = vmatpush1.bf16.msra.mxu0 %v1018
  %1548 = vmatprep.subr.bf16.mxu0 %v1023
  %1549 = vmatpush1.bf16.msra.mxu0 %v1022
  %1550 = vmatprep.subr.bf16.mxu0 %v1027
  %1551 = vmatpush1.bf16.msra.mxu0 %v1026
  %1552 = vmatprep.subr.bf16.mxu0 %v1031
  %1553 = vmatpush1.bf16.msra.mxu0 %v1030
  %1554 = vmatprep.subr.bf16.mxu0 %v1035
  %1555 = vmatpush1.bf16.msra.mxu0 %v1034
  %1556 = vmatprep.subr.bf16.mxu0 %v1039
  %1557 = vmatpush1.bf16.msra.mxu0 %v1038
  %1558 = vmatprep.subr.bf16.mxu0 %v1043
  %1559 = vmatpush1.bf16.msra.mxu0 %v1042
  %1560 = vmatprep.subr.bf16.mxu0 %v1047
  %1561 = vmatpush1.bf16.msra.mxu0 %v1046
  %1562 = vmatprep.subr.bf16.mxu0 %v1051
  %1563 = vmatpush1.bf16.msra.mxu0 %v1050
  %1564 = vmatprep.subr.bf16.mxu0 %v1055
  %1565 = vmatpush1.bf16.msra.mxu0 %v1054
  %1566 = vmatprep.subr.bf16.mxu0 %v1059
  %1567 = vmatpush1.bf16.msra.mxu0 %v1058
  %1568 = vmatprep.subr.bf16.mxu0 %v1063
  %1569 = vmatpush1.bf16.msra.mxu0 %v1062
  %1570 = vmatprep.subr.bf16.mxu0 %v1067
  %1571 = vmatpush1.bf16.msra.mxu0 %v1066
  %1572 = vmatprep.subr.bf16.mxu0 %v1071
  %1573 = vmatpush1.bf16.msra.mxu0 %v1070
  %1574 = vmatprep.mubr.bf16.mxu0 %v272
  %1575 = vmatmul.mubr.bf16.gmra.mrb[0].mxu0 %v271
  %v1576 = vpop.f32.mrb[0].mxu0
  %v1577 = vadd.f32 %v1534, %v1576
  %v1578 = vpop.f32.mrb[0].mxu0
  %v1579 = vadd.f32 %v1536, %v1578
  %v1580 = vpop.f32.mrb[0].mxu0
  %v1581 = vadd.f32 %v1538, %v1580
  %v1582 = vpop.f32.mrb[0].mxu0
  %v1583 = vadd.f32 %v1540, %v1582
  %1584 = vdwg.mxu0
  %1585 = vmatprep.subr.bf16.mxu0 %v1075
  %1586 = vmatpush1.bf16.msra.mxu0 %v1074
  %1587 = vmatprep.subr.bf16.mxu0 %v1079
  %1588 = vmatpush1.bf16.msra.mxu0 %v1078
  %1589 = vmatprep.subr.bf16.mxu0 0
  %1590 = vmatpush1.bf16.msra.mxu0 0
  %1591 = vmatprep.subr.bf16.mxu0 0
  %1592 = vmatpush1.bf16.msra.mxu0 0
  %1593 = vmatprep.subr.bf16.mxu0 0
  %1594 = vmatpush1.bf16.msra.mxu0 0
  %1595 = vmatprep.subr.bf16.mxu0 0
  %1596 = vmatpush1.bf16.msra.mxu0 0
  %1597 = vmatprep.subr.bf16.mxu0 0
  %1598 = vmatpush1.bf16.msra.mxu0 0
  %1599 = vmatprep.subr.bf16.mxu0 0
  %1600 = vmatpush1.bf16.msra.mxu0 0
  %1601 = vmatprep.subr.bf16.mxu0 0
  %1602 = vmatpush1.bf16.msra.mxu0 0
  %1603 = vmatprep.subr.bf16.mxu0 0
  %1604 = vmatpush1.bf16.msra.mxu0 0
  %1605 = vmatprep.subr.bf16.mxu0 0
  %1606 = vmatpush1.bf16.msra.mxu0 0
  %1607 = vmatprep.subr.bf16.mxu0 0
  %1608 = vmatpush1.bf16.msra.mxu0 0
  %1609 = vmatprep.subr.bf16.mxu0 0
  %1610 = vmatpush1.bf16.msra.mxu0 0
  %1611 = vmatprep.subr.bf16.mxu0 0
  %1612 = vmatpush1.bf16.msra.mxu0 0
  %1613 = vmatprep.subr.bf16.mxu0 0
  %1614 = vmatpush1.bf16.msra.mxu0 0
  %1615 = vmatprep.subr.bf16.mxu0 0
  %1616 = vmatpush1.bf16.msra.mxu0 0
  %1617 = vmatprep.mubr.bf16.mxu0 0
  %1618 = vmatmul.mubr.bf16.gmra.mrb[0].mxu0 %v1282
  %v1619 = vpop.f32.mrb[0].mxu0
  %v1620 = vadd.f32 %v1577, %v1619
  %v1621 = vpop.f32.mrb[0].mxu0
  %v1622 = vadd.f32 %v1579, %v1621
  %v1623 = vpop.f32.mrb[0].mxu0
  %v1624 = vadd.f32 %v1581, %v1623
  %v1625 = vpop.f32.mrb[0].mxu0
  %v1626 = vadd.f32 %v1583, %v1625
  %1627 = vdwg.mxu0
  %v1628 = vmax.f32 %v1448, 0.0
  %v1629 = vmax.f32 %v1450, 0.0
  %v1630 = vmax.f32 %v1620, 0.0
  %v1631 = vmax.f32 %v1622, 0.0
  %v1632 = vmax.f32 %v1452, 0.0
  %v1633 = vmax.f32 %v1454, 0.0
  %v1634 = vmax.f32 %v1624, 0.0
  %v1635 = vmax.f32 %v1626, 0.0
  %1636 = vst [vmem:[%s3] sm:$0xff] %v1628
  %1637 = vst [vmem:[%s3 + $0x8] sm:$0xff] %v1629
  %1638 = vst [vmem:[%s3 + $0x10] sm:$0xff] %v1630
  %1639 = vst [vmem:[%s3 + $0x18] sm:$0xff] %v1631
  %1640 = vst [vmem:[%s3 + $0x20] sm:$0xff] %v1632
  %1641 = vst [vmem:[%s3 + $0x28] sm:$0xff] %v1633
  %1642 = vst [vmem:[%s3 + $0x30] sm:$0xff] %v1634
  %1643 = vst [vmem:[%s3 + $0x38] sm:$0xff] %v1635
  // Predicated region
  $region14: #{forward.6} parent=0 // pred_check
    _
  $region15: #{forward.6} parent=0 // pred_check_branch
    %1645 = sbr.rel (0) target = $region17
  $region16: #{forward.6} parent=0 // pred_region
    _
  $region17: #{forward.6} parent=0 // pred_fallthru
    _
  // Predicated region
  $region18: #{forward.6} parent=0 // pred_check
    _
  $region19: #{forward.6} parent=0 // pred_check_branch
    %1647 = sbr.rel (0) target = $region21
  $region20: #{forward.6} parent=0 // pred_region
    _
  $region21: #{forward.6} parent=0 // pred_fallthru
    _

</llo_original>
